<compile_context>
chip_gen: v6e
topology: v6e:2x2x1
jax: 0.10.0
libtpu: 0.0.40
codegen_flags: <defaults>
</compile_context>

<pallas_src>
import functools

import jax
import jax.numpy as jnp
from jax.experimental import pallas as pl
from jax.experimental.pallas import tpu as pltpu

IN_PAD = 64            # 63 input features padded to 64
CLS_HID_PAD = 128      # classifier hidden dim padded 64 -> 128 (lane-dense)
CLS_PAD = 128          # num_classes padded to 128 (lane-dense output)
NEG_INF = -1e30        # bias for padded class columns

TB_MAX = 1024              # max batch rows per grid step
SINGLE_TILE_MAX = 256      # below this, use one tile == round_up(B, 8)


# ----------------------------------------------------------------------------
# Kernel
# ----------------------------------------------------------------------------
def static_gesture_kernel(
    x_ref,                 # [TB, 64] bf16
    w1_ref, b1_ref,        # EmbeddingModel.fc1        (64  -> 128)   [padded K]
    rw1_ref, rb1_ref,      # res_block1 linear+BN fold (128 -> 128)
    w2_ref, b2_ref,        # EmbeddingModel.fc2        (128 -> 256)
    rw2_ref, rb2_ref,      # res_block2 linear+BN fold (256 -> 256)
    cw1_ref, cb1_ref,      # ClassificationModel.fc1   (256 -> 128)   [padded N]
    cw2_ref, cb2_ref,      # ClassificationModel.fc2   (128 -> 128)   [padded K,N]
    out_ref,               # [TB, 128] f32 (log_softmax, padded classes)
):
    f32 = jnp.float32
    bf16 = jnp.bfloat16

    def mm(a, w_ref):
        # bf16 x bf16 matmul on the MXU, f32 accumulation.
        return jnp.dot(a.astype(bf16), w_ref[...], preferred_element_type=f32)

    # --- EmbeddingModel ---
    x = x_ref[...]                                            # already bf16
    h = jnp.maximum(mm(x, w1_ref) + b1_ref[...], 0.0)         # fc1 + relu

    # res_block1: h + Dropout(ReLU(BN(Linear(h))))  (BN folded, dropout = id)
    t = mm(h, rw1_ref) + rb1_ref[...]
    h = h + jnp.maximum(t, 0.0)

    h = jnp.maximum(mm(h, w2_ref) + b2_ref[...], 0.0)         # fc2 + relu

    # res_block2
    t = mm(h, rw2_ref) + rb2_ref[...]
    h = h + jnp.maximum(t, 0.0)

    # --- top-level dropout(0.5) -> identity in eval ---

    # --- ClassificationModel ---
    h = jnp.maximum(mm(h, cw1_ref) + cb1_ref[...], 0.0)       # fc1 + relu
    # dropout(0.3) -> identity
    z = mm(h, cw2_ref) + cb2_ref[...]                         # logits (f32)

    # log_softmax along class axis (padded class columns carry a -1e30 bias,
    # so they contribute 0 to the sum-exp and the result is exact).
    m = jnp.max(z, axis=1, keepdims=True)
    lse = jnp.log(jnp.sum(jnp.exp(z - m), axis=1, keepdims=True)) + m
    out_ref[...] = (z - lse).astype(out_ref.dtype)


# ----------------------------------------------------------------------------
# Parameter preparation (call ONCE, cache the result)
# ----------------------------------------------------------------------------
def prepare_kernel_params(params):
    """Fold BN into residual Linears, pad to lane-friendly shapes, cast to bf16.

    Weights -> bf16 (MXU native); biases stay f32 (added post-accumulation).
    """
    bf16 = jnp.bfloat16
    f32 = jnp.float32

    # Fold BatchNorm (eval) into residual linear weights/biases.
    rw1 = (params["res1_w"] * params["bn1_scale"]).astype(bf16)
    rb1 = (params["res1_b"] * params["bn1_scale"] + params["bn1_shift"]).astype(f32)
    rw2 = (params["res2_w"] * params["bn2_scale"]).astype(bf16)
    rb2 = (params["res2_b"] * params["bn2_scale"] + params["bn2_shift"]).astype(f32)

    # Embedding fc1: pad input-feature dim 63 -> IN_PAD (zero rows, exact).
    e1w = params["emb1_w"]
    w1 = jnp.zeros((IN_PAD, e1w.shape[1]), f32).at[: e1w.shape[0], :].set(e1w)
    w1 = w1.astype(bf16)
    b1 = params["emb1_b"].astype(f32)

    w2 = params["emb2_w"].astype(bf16)
    b2 = params["emb2_b"].astype(f32)

    # Classifier fc1: pad hidden dim 64 -> 128 with zero weight/bias columns
    # (ReLU(0) = 0, so the padding is exact and the intermediate is lane-dense).
    c1w, c1b = params["cls1_w"], params["cls1_b"]
    hid = c1w.shape[1]
    cw1 = jnp.zeros((c1w.shape[0], CLS_HID_PAD), f32).at[:, :hid].set(c1w)
    cw1 = cw1.astype(bf16)
    cb1 = jnp.zeros((1, CLS_HID_PAD), f32).at[:, :hid].set(c1b)

    # Classifier fc2: zero rows for the padded hidden inputs; classes C -> 128
    # with zero weight columns and -1e30 bias so padded logits vanish.
    c2w, c2b = params["cls2_w"], params["cls2_b"]
    C = c2w.shape[1]
    cw2 = jnp.zeros((CLS_HID_PAD, CLS_PAD), f32).at[:hid, :C].set(c2w)
    cw2 = cw2.astype(bf16)
    cb2 = jnp.full((1, CLS_PAD), NEG_INF, f32).at[:, :C].set(c2b)

    kparams = (w1, b1, rw1, rb1, w2, b2, rw2, rb2, cw1, cb1, cw2, cb2)
    return kparams, C


# ----------------------------------------------------------------------------
# Tiling / pallas_call wrapper
# ----------------------------------------------------------------------------
def _choose_tile(batch):
    """Pick (tile_rows, padded_batch).

    Small batches: one tile of round_up(B, 8) rows (no wasted compute).
    Larger batches: >= 2 tiles (so the "parallel" grid axis can use both v7x
    TensorCores) with tile rows capped at TB_MAX.
    """
    b8 = max(8, ((batch + 7) // 8) * 8)
    if b8 <= SINGLE_TILE_MAX:
        n_tiles = 1
    else:
        n_tiles = max(2, -(-b8 // TB_MAX))
    tb = ((-(-b8 // n_tiles) + 7) // 8) * 8     # ceil(b8/n_tiles) rounded to 8
    return tb, tb * n_tiles


@functools.partial(jax.jit, static_argnames=("num_classes", "single_buffer_weights"))
def _forward_impl(x, kparams, num_classes, single_buffer_weights):
    B = x.shape[0]
    tb, b_pad = _choose_tile(B)

    # Pad batch to a multiple of the tile and features 63 -> IN_PAD; cast the
    # activations to bf16 here (halves input DMA traffic, matmuls are bf16).
    xp = jnp.zeros((b_pad, IN_PAD), jnp.bfloat16)
    xp = xp.at[:B, : x.shape[1]].set(x.astype(jnp.bfloat16))

    def tile_map(i):
        return (i, 0)

    def const_map(i):
        return (0, 0)

    if single_buffer_weights:
        # Constant index_map -> never refetched; single-buffer to halve the
        # VMEM footprint of the resident weights.
        def wspec(p):
            return pl.BlockSpec(p.shape, const_map, pipeline_mode=pl.Buffered(1))
    else:
        def wspec(p):
            return pl.BlockSpec(p.shape, const_map)

    weight_specs = [wspec(p) for p in kparams]

    out = pl.pallas_call(
        static_gesture_kernel,
        out_shape=jax.ShapeDtypeStruct((b_pad, CLS_PAD), jnp.float32),
        grid_spec=pltpu.PrefetchScalarGridSpec(
            num_scalar_prefetch=0,
            grid=(b_pad // tb,),
            in_specs=[pl.BlockSpec((tb, IN_PAD), tile_map)] + weight_specs,
            out_specs=pl.BlockSpec((tb, CLS_PAD), tile_map),
        ),
        compiler_params=pltpu.CompilerParams(
            dimension_semantics=("parallel",),
            # 32 MiB: > v5e's 16 MiB default (needed once tb reaches 1024),
            # comfortably inside every generation's physical VMEM.
            vmem_limit_bytes=32 * 1024 * 1024,
        ),
    )(xp, *kparams)
    return out[:B, :num_classes]


_SINGLE_BUFFER_WEIGHTS_OK = True


def static_gesture_forward(x, kparams, num_classes):
    """x: [B, 63] float32. kparams: output of prepare_kernel_params (cached)."""
    global _SINGLE_BUFFER_WEIGHTS_OK
    if _SINGLE_BUFFER_WEIGHTS_OK:
        try:
            return _forward_impl(x, kparams, num_classes, True)
        except Exception:
            # Installed JAX rejected Buffered(1) weight specs; fall back to the
            # default double-buffered (still never refetched) weight specs.
            _SINGLE_BUFFER_WEIGHTS_OK = False
    return _forward_impl(x, kparams, num_classes, False)


# ----------------------------------------------------------------------------
# Synthetic parameters + references
# ----------------------------------------------------------------------------
def init_params(key, num_classes):
    """Deterministic synthetic parameters matching the PyTorch module shapes.

    Linear weights are stored as [in, out] (transposed vs. PyTorch's [out, in]).
    BatchNorm1d is represented by folded per-feature scale/shift (eval mode).
    Biases / per-feature vectors are kept 2D [1, N] for clean VMEM layout.
    """
    ks = jax.random.split(key, 8)
    eps = 1e-5

    def lin(k, fan_in, fan_out):
        kw, kb = jax.random.split(k)
        bound = 1.0 / jnp.sqrt(jnp.float32(fan_in))
        w = jax.random.uniform(kw, (fan_in, fan_out), jnp.float32, -bound, bound)
        b = jax.random.uniform(kb, (1, fan_out), jnp.float32, -bound, bound)
        return w, b

    def bn(k, n):
        kg, kb, km, kv = jax.random.split(k, 4)
        gamma = 1.0 + 0.1 * jax.random.normal(kg, (1, n), jnp.float32)
        beta = 0.1 * jax.random.normal(kb, (1, n), jnp.float32)
        running_mean = 0.1 * jax.random.normal(km, (1, n), jnp.float32)
        running_var = jax.random.uniform(kv, (1, n), jnp.float32, 0.5, 1.5)
        scale = gamma / jnp.sqrt(running_var + eps)
        shift = beta - running_mean * scale
        return scale, shift

    p = {}
    p["emb1_w"], p["emb1_b"] = lin(ks[0], 63, 128)
    p["res1_w"], p["res1_b"] = lin(ks[1], 128, 128)
    p["bn1_scale"], p["bn1_shift"] = bn(ks[2], 128)
    p["emb2_w"], p["emb2_b"] = lin(ks[3], 128, 256)
    p["res2_w"], p["res2_b"] = lin(ks[4], 256, 256)
    p["bn2_scale"], p["bn2_shift"] = bn(ks[5], 256)
    p["cls1_w"], p["cls1_b"] = lin(ks[6], 256, 64)
    p["cls2_w"], p["cls2_b"] = lin(ks[7], 64, num_classes)
    return p


def reference_forward_f32(x, p):
    """Pure-JAX full-f32 reference (eval-mode semantics, unfolded BN)."""
    h = jnp.maximum(x @ p["emb1_w"] + p["emb1_b"], 0.0)
    t = jnp.maximum((h @ p["res1_w"] + p["res1_b"]) * p["bn1_scale"] + p["bn1_shift"], 0.0)
    h = h + t
    h = jnp.maximum(h @ p["emb2_w"] + p["emb2_b"], 0.0)
    t = jnp.maximum((h @ p["res2_w"] + p["res2_b"]) * p["bn2_scale"] + p["bn2_shift"], 0.0)
    h = h + t
    h = jnp.maximum(h @ p["cls1_w"] + p["cls1_b"], 0.0)
    z = h @ p["cls2_w"] + p["cls2_b"]
    return jax.nn.log_softmax(z, axis=1)


def reference_forward_matched(x, kparams, num_classes):
    """Pure-JAX reference that mirrors the kernel's bf16/f32 precision choices."""
    (w1, b1, rw1, rb1, w2, b2, rw2, rb2, cw1, cb1, cw2, cb2) = kparams
    f32, bf16 = jnp.float32, jnp.bfloat16

    def mm(a, w):
        return jnp.dot(a.astype(bf16), w, preferred_element_type=f32)

    xp = jnp.zeros((x.shape[0], IN_PAD), bf16).at[:, : x.shape[1]].set(x.astype(bf16))
    h = jnp.maximum(mm(xp, w1) + b1, 0.0)
    h = h + jnp.maximum(mm(h, rw1) + rb1, 0.0)
    h = jnp.maximum(mm(h, w2) + b2, 0.0)
    h = h + jnp.maximum(mm(h, rw2) + rb2, 0.0)
    h = jnp.maximum(mm(h, cw1) + cb1, 0.0)
    z = mm(h, cw2) + cb2
    m = jnp.max(z, axis=1, keepdims=True)
    lse = jnp.log(jnp.sum(jnp.exp(z - m), axis=1, keepdims=True)) + m
    return (z - lse)[:, :num_classes]


# ----------------------------------------------------------------------------
if __name__ == "__main__":
    key = jax.random.PRNGKey(0)
    k_x, k_p = jax.random.split(key)

    batch = 8
    num_classes = 10
    x = jax.random.normal(k_x, (batch, 63), jnp.float32)
    params = init_params(k_p, num_classes)

    # BN fold / padding / bf16 cast done once, outside the per-call path.
    kparams, C = prepare_kernel_params(params)

    out = static_gesture_forward(x, kparams, C)
    out = jax.block_until_ready(out)

    assert out.shape == (batch, num_classes)

    # Exact-precision-matched reference (same bf16 matmuls, f32 epilogue).
    ref_matched = reference_forward_matched(x, kparams, C)
    assert jnp.allclose(out, ref_matched, atol=1e-4, rtol=1e-4)

    # Full-f32 reference: loose tolerance accounts for bf16 weight/activation
    # rounding through the six matmuls.
    ref_f32 = reference_forward_f32(x, params)
    assert jnp.allclose(out, ref_f32, atol=0.1, rtol=0.1)

    # log_softmax rows should exponentiate-and-sum to ~1.
    assert jnp.allclose(jnp.sum(jnp.exp(out), axis=1), 1.0, atol=1e-3)

    print("KERNEL_OK")
</pallas_src>

<mosaic_0001>
module attributes {stable_mosaic.version = 11 : i64} {
  func.func @static_gesture_kernel(%arg0: i32, %arg1: memref<8x64xbf16, #tpu.memory_space<vmem>>, %arg2: memref<64x128xbf16, #tpu.memory_space<vmem>>, %arg3: memref<1x128xf32, #tpu.memory_space<vmem>>, %arg4: memref<128x128xbf16, #tpu.memory_space<vmem>>, %arg5: memref<1x128xf32, #tpu.memory_space<vmem>>, %arg6: memref<128x256xbf16, #tpu.memory_space<vmem>>, %arg7: memref<1x256xf32, #tpu.memory_space<vmem>>, %arg8: memref<256x256xbf16, #tpu.memory_space<vmem>>, %arg9: memref<1x256xf32, #tpu.memory_space<vmem>>, %arg10: memref<256x128xbf16, #tpu.memory_space<vmem>>, %arg11: memref<1x128xf32, #tpu.memory_space<vmem>>, %arg12: memref<128x128xbf16, #tpu.memory_space<vmem>>, %arg13: memref<1x128xf32, #tpu.memory_space<vmem>>, %arg14: memref<8x128xf32, #tpu.memory_space<vmem>>) attributes {dimension_semantics = [#tpu.dimension_semantics<parallel>], iteration_bounds = array<i64: 1>, scalar_prefetch = 0 : i64, scratch_operands = 0 : i64, tpu.core_type = #tpu.core_type<tc>, window_params = [{transform_indices = @transform_0, window_bounds = array<i64: 8, 64>}, {pipeline_mode = #tpu.pipeline_mode<synchronous>, transform_indices = @transform_1, window_bounds = array<i64: 64, 128>}, {pipeline_mode = #tpu.pipeline_mode<synchronous>, transform_indices = @transform_2, window_bounds = array<i64: 1, 128>}, {pipeline_mode = #tpu.pipeline_mode<synchronous>, transform_indices = @transform_3, window_bounds = array<i64: 128, 128>}, {pipeline_mode = #tpu.pipeline_mode<synchronous>, transform_indices = @transform_4, window_bounds = array<i64: 1, 128>}, {pipeline_mode = #tpu.pipeline_mode<synchronous>, transform_indices = @transform_5, window_bounds = array<i64: 128, 256>}, {pipeline_mode = #tpu.pipeline_mode<synchronous>, transform_indices = @transform_6, window_bounds = array<i64: 1, 256>}, {pipeline_mode = #tpu.pipeline_mode<synchronous>, transform_indices = @transform_7, window_bounds = array<i64: 256, 256>}, {pipeline_mode = #tpu.pipeline_mode<synchronous>, transform_indices = @transform_8, window_bounds = array<i64: 1, 256>}, {pipeline_mode = #tpu.pipeline_mode<synchronous>, transform_indices = @transform_9, window_bounds = array<i64: 256, 128>}, {pipeline_mode = #tpu.pipeline_mode<synchronous>, transform_indices = @transform_10, window_bounds = array<i64: 1, 128>}, {pipeline_mode = #tpu.pipeline_mode<synchronous>, transform_indices = @transform_11, window_bounds = array<i64: 128, 128>}, {pipeline_mode = #tpu.pipeline_mode<synchronous>, transform_indices = @transform_12, window_bounds = array<i64: 1, 128>}, {transform_indices = @transform_13, window_bounds = array<i64: 8, 128>}]} {
    %c0 = arith.constant 0 : index
    %c0_0 = arith.constant 0 : index
    %0 = vector.load %arg1[%c0, %c0_0] : memref<8x64xbf16, #tpu.memory_space<vmem>>, vector<8x64xbf16>
    %c0_1 = arith.constant 0 : index
    %c0_2 = arith.constant 0 : index
    %1 = vector.load %arg2[%c0_1, %c0_2] : memref<64x128xbf16, #tpu.memory_space<vmem>>, vector<64x128xbf16>
    %cst = arith.constant dense<0.000000e+00> : vector<8x128xf32>
    %2 = tpu.matmul %0, %1, %cst {dimension_numbers = #tpu.dot_dimension_numbers<[1], [0], [0], [1], [0, 0, 1, 1], [], []>} : vector<8x64xbf16>, vector<64x128xbf16>, vector<8x128xf32> -> vector<8x128xf32>
    %c0_3 = arith.constant 0 : index
    %c0_4 = arith.constant 0 : index
    %3 = vector.load %arg3[%c0_3, %c0_4] : memref<1x128xf32, #tpu.memory_space<vmem>>, vector<1x128xf32>
    %4 = vector.broadcast %3 : vector<1x128xf32> to vector<8x128xf32>
    %5 = arith.addf %2, %4 : vector<8x128xf32>
    %cst_5 = arith.constant 0.000000e+00 : f32
    %6 = vector.broadcast %cst_5 : f32 to vector<8x128xf32>
    %7 = arith.maximumf %5, %6 : vector<8x128xf32>
    %8 = arith.truncf %7 : vector<8x128xf32> to vector<8x128xbf16>
    %c0_6 = arith.constant 0 : index
    %c0_7 = arith.constant 0 : index
    %9 = vector.load %arg4[%c0_6, %c0_7] : memref<128x128xbf16, #tpu.memory_space<vmem>>, vector<128x128xbf16>
    %cst_8 = arith.constant dense<0.000000e+00> : vector<8x128xf32>
    %10 = tpu.matmul %8, %9, %cst_8 {dimension_numbers = #tpu.dot_dimension_numbers<[1], [0], [0], [1], [0, 0, 1, 1], [], []>} : vector<8x128xbf16>, vector<128x128xbf16>, vector<8x128xf32> -> vector<8x128xf32>
    %c0_9 = arith.constant 0 : index
    %c0_10 = arith.constant 0 : index
    %11 = vector.load %arg5[%c0_9, %c0_10] : memref<1x128xf32, #tpu.memory_space<vmem>>, vector<1x128xf32>
    %12 = vector.broadcast %11 : vector<1x128xf32> to vector<8x128xf32>
    %13 = arith.addf %10, %12 : vector<8x128xf32>
    %cst_11 = arith.constant 0.000000e+00 : f32
    %14 = vector.broadcast %cst_11 : f32 to vector<8x128xf32>
    %15 = arith.maximumf %13, %14 : vector<8x128xf32>
    %16 = arith.addf %7, %15 : vector<8x128xf32>
    %17 = arith.truncf %16 : vector<8x128xf32> to vector<8x128xbf16>
    %c0_12 = arith.constant 0 : index
    %c0_13 = arith.constant 0 : index
    %18 = vector.load %arg6[%c0_12, %c0_13] : memref<128x256xbf16, #tpu.memory_space<vmem>>, vector<128x256xbf16>
    %cst_14 = arith.constant dense<0.000000e+00> : vector<8x256xf32>
    %19 = tpu.matmul %17, %18, %cst_14 {dimension_numbers = #tpu.dot_dimension_numbers<[1], [0], [0], [1], [0, 0, 1, 1], [], []>} : vector<8x128xbf16>, vector<128x256xbf16>, vector<8x256xf32> -> vector<8x256xf32>
    %c0_15 = arith.constant 0 : index
    %c0_16 = arith.constant 0 : index
    %20 = vector.load %arg7[%c0_15, %c0_16] : memref<1x256xf32, #tpu.memory_space<vmem>>, vector<1x256xf32>
    %21 = vector.broadcast %20 : vector<1x256xf32> to vector<8x256xf32>
    %22 = arith.addf %19, %21 : vector<8x256xf32>
    %cst_17 = arith.constant 0.000000e+00 : f32
    %23 = vector.broadcast %cst_17 : f32 to vector<8x256xf32>
    %24 = arith.maximumf %22, %23 : vector<8x256xf32>
    %25 = arith.truncf %24 : vector<8x256xf32> to vector<8x256xbf16>
    %c0_18 = arith.constant 0 : index
    %c0_19 = arith.constant 0 : index
    %26 = vector.load %arg8[%c0_18, %c0_19] : memref<256x256xbf16, #tpu.memory_space<vmem>>, vector<256x256xbf16>
    %cst_20 = arith.constant dense<0.000000e+00> : vector<8x256xf32>
    %27 = tpu.matmul %25, %26, %cst_20 {dimension_numbers = #tpu.dot_dimension_numbers<[1], [0], [0], [1], [0, 0, 1, 1], [], []>} : vector<8x256xbf16>, vector<256x256xbf16>, vector<8x256xf32> -> vector<8x256xf32>
    %c0_21 = arith.constant 0 : index
    %c0_22 = arith.constant 0 : index
    %28 = vector.load %arg9[%c0_21, %c0_22] : memref<1x256xf32, #tpu.memory_space<vmem>>, vector<1x256xf32>
    %29 = vector.broadcast %28 : vector<1x256xf32> to vector<8x256xf32>
    %30 = arith.addf %27, %29 : vector<8x256xf32>
    %cst_23 = arith.constant 0.000000e+00 : f32
    %31 = vector.broadcast %cst_23 : f32 to vector<8x256xf32>
    %32 = arith.maximumf %30, %31 : vector<8x256xf32>
    %33 = arith.addf %24, %32 : vector<8x256xf32>
    %34 = arith.truncf %33 : vector<8x256xf32> to vector<8x256xbf16>
    %c0_24 = arith.constant 0 : index
    %c0_25 = arith.constant 0 : index
    %35 = vector.load %arg10[%c0_24, %c0_25] : memref<256x128xbf16, #tpu.memory_space<vmem>>, vector<256x128xbf16>
    %cst_26 = arith.constant dense<0.000000e+00> : vector<8x128xf32>
    %36 = tpu.matmul %34, %35, %cst_26 {dimension_numbers = #tpu.dot_dimension_numbers<[1], [0], [0], [1], [0, 0, 1, 1], [], []>} : vector<8x256xbf16>, vector<256x128xbf16>, vector<8x128xf32> -> vector<8x128xf32>
    %c0_27 = arith.constant 0 : index
    %c0_28 = arith.constant 0 : index
    %37 = vector.load %arg11[%c0_27, %c0_28] : memref<1x128xf32, #tpu.memory_space<vmem>>, vector<1x128xf32>
    %38 = vector.broadcast %37 : vector<1x128xf32> to vector<8x128xf32>
    %39 = arith.addf %36, %38 : vector<8x128xf32>
    %cst_29 = arith.constant 0.000000e+00 : f32
    %40 = vector.broadcast %cst_29 : f32 to vector<8x128xf32>
    %41 = arith.maximumf %39, %40 : vector<8x128xf32>
    %42 = arith.truncf %41 : vector<8x128xf32> to vector<8x128xbf16>
    %c0_30 = arith.constant 0 : index
    %c0_31 = arith.constant 0 : index
    %43 = vector.load %arg12[%c0_30, %c0_31] : memref<128x128xbf16, #tpu.memory_space<vmem>>, vector<128x128xbf16>
    %cst_32 = arith.constant dense<0.000000e+00> : vector<8x128xf32>
    %44 = tpu.matmul %42, %43, %cst_32 {dimension_numbers = #tpu.dot_dimension_numbers<[1], [0], [0], [1], [0, 0, 1, 1], [], []>} : vector<8x128xbf16>, vector<128x128xbf16>, vector<8x128xf32> -> vector<8x128xf32>
    %c0_33 = arith.constant 0 : index
    %c0_34 = arith.constant 0 : index
    %45 = vector.load %arg13[%c0_33, %c0_34] : memref<1x128xf32, #tpu.memory_space<vmem>>, vector<1x128xf32>
    %46 = vector.broadcast %45 : vector<1x128xf32> to vector<8x128xf32>
    %47 = arith.addf %44, %46 : vector<8x128xf32>
    %cst_35 = arith.constant dense<0xFF800000> : vector<8xf32>
    %48 = vector.multi_reduction <maximumf>, %47, %cst_35 [1] : vector<8x128xf32> to vector<8xf32>
    %49 = vector.shape_cast %48 : vector<8xf32> to vector<8x1xf32>
    %50 = vector.broadcast %49 : vector<8x1xf32> to vector<8x128xf32>
    %51 = arith.subf %47, %50 : vector<8x128xf32>
    %52 = math.exp %51 : vector<8x128xf32>
    %cst_36 = arith.constant dense<0.000000e+00> : vector<8xf32>
    %53 = vector.multi_reduction <add>, %52, %cst_36 [1] : vector<8x128xf32> to vector<8xf32>
    %54 = vector.shape_cast %53 : vector<8xf32> to vector<8x1xf32>
    %55 = math.log %54 : vector<8x1xf32>
    %56 = arith.addf %55, %49 : vector<8x1xf32>
    %57 = vector.broadcast %56 : vector<8x1xf32> to vector<8x128xf32>
    %58 = arith.subf %47, %57 : vector<8x128xf32>
    %c0_37 = arith.constant 0 : index
    %c0_38 = arith.constant 0 : index
    %59 = vector.load %arg14[%c0_37, %c0_38] : memref<8x128xf32, #tpu.memory_space<vmem>>, vector<8x128xf32>
    tpu.vector_store %arg14[%c0_37, %c0_38], %58 {strides = array<i32>} : memref<8x128xf32, #tpu.memory_space<vmem>>, vector<8x128xf32>,
    return
  }
  func.func @transform_0(%arg0: i32) -> (i32, i32) {
    %c0_i32 = arith.constant 0 : i32
    %c0_i32_0 = arith.constant 0 : i32
    return %arg0, %c0_i32 : i32, i32
  }
  func.func @transform_1(%arg0: i32) -> (i32, i32) {
    %c0_i32 = arith.constant 0 : i32
    %c0_i32_0 = arith.constant 0 : i32
    %c0_i32_1 = arith.constant 0 : i32
    return %c0_i32, %c0_i32_0 : i32, i32
  }
  func.func @transform_2(%arg0: i32) -> (i32, i32) {
    %c0_i32 = arith.constant 0 : i32
    %c0_i32_0 = arith.constant 0 : i32
    %c0_i32_1 = arith.constant 0 : i32
    return %c0_i32, %c0_i32_0 : i32, i32
  }
  func.func @transform_3(%arg0: i32) -> (i32, i32) {
    %c0_i32 = arith.constant 0 : i32
    %c0_i32_0 = arith.constant 0 : i32
    %c0_i32_1 = arith.constant 0 : i32
    return %c0_i32, %c0_i32_0 : i32, i32
  }
  func.func @transform_4(%arg0: i32) -> (i32, i32) {
    %c0_i32 = arith.constant 0 : i32
    %c0_i32_0 = arith.constant 0 : i32
    %c0_i32_1 = arith.constant 0 : i32
    return %c0_i32, %c0_i32_0 : i32, i32
  }
  func.func @transform_5(%arg0: i32) -> (i32, i32) {
    %c0_i32 = arith.constant 0 : i32
    %c0_i32_0 = arith.constant 0 : i32
    %c0_i32_1 = arith.constant 0 : i32
    return %c0_i32, %c0_i32_0 : i32, i32
  }
  func.func @transform_6(%arg0: i32) -> (i32, i32) {
    %c0_i32 = arith.constant 0 : i32
    %c0_i32_0 = arith.constant 0 : i32
    %c0_i32_1 = arith.constant 0 : i32
    return %c0_i32, %c0_i32_0 : i32, i32
  }
  func.func @transform_7(%arg0: i32) -> (i32, i32) {
    %c0_i32 = arith.constant 0 : i32
    %c0_i32_0 = arith.constant 0 : i32
    %c0_i32_1 = arith.constant 0 : i32
    return %c0_i32, %c0_i32_0 : i32, i32
  }
  func.func @transform_8(%arg0: i32) -> (i32, i32) {
    %c0_i32 = arith.constant 0 : i32
    %c0_i32_0 = arith.constant 0 : i32
    %c0_i32_1 = arith.constant 0 : i32
    return %c0_i32, %c0_i32_0 : i32, i32
  }
  func.func @transform_9(%arg0: i32) -> (i32, i32) {
    %c0_i32 = arith.constant 0 : i32
    %c0_i32_0 = arith.constant 0 : i32
    %c0_i32_1 = arith.constant 0 : i32
    return %c0_i32, %c0_i32_0 : i32, i32
  }
  func.func @transform_10(%arg0: i32) -> (i32, i32) {
    %c0_i32 = arith.constant 0 : i32
    %c0_i32_0 = arith.constant 0 : i32
    %c0_i32_1 = arith.constant 0 : i32
    return %c0_i32, %c0_i32_0 : i32, i32
  }
  func.func @transform_11(%arg0: i32) -> (i32, i32) {
    %c0_i32 = arith.constant 0 : i32
    %c0_i32_0 = arith.constant 0 : i32
    %c0_i32_1 = arith.constant 0 : i32
    return %c0_i32, %c0_i32_0 : i32, i32
  }
  func.func @transform_12(%arg0: i32) -> (i32, i32) {
    %c0_i32 = arith.constant 0 : i32
    %c0_i32_0 = arith.constant 0 : i32
    %c0_i32_1 = arith.constant 0 : i32
    return %c0_i32, %c0_i32_0 : i32, i32
  }
  func.func @transform_13(%arg0: i32) -> (i32, i32) {
    %c0_i32 = arith.constant 0 : i32
    %c0_i32_0 = arith.constant 0 : i32
    return %arg0, %c0_i32 : i32, i32
  }
}

module attributes {stable_mosaic.version = 11 : i64} {
  func.func @static_gesture_kernel(%arg0: i32, %arg1: memref<8x64xbf16, #tpu.memory_space<vmem>>, %arg2: memref<64x128xbf16, #tpu.memory_space<vmem>>, %arg3: memref<1x128xf32, #tpu.memory_space<vmem>>, %arg4: memref<128x128xbf16, #tpu.memory_space<vmem>>, %arg5: memref<1x128xf32, #tpu.memory_space<vmem>>, %arg6: memref<128x256xbf16, #tpu.memory_space<vmem>>, %arg7: memref<1x256xf32, #tpu.memory_space<vmem>>, %arg8: memref<256x256xbf16, #tpu.memory_space<vmem>>, %arg9: memref<1x256xf32, #tpu.memory_space<vmem>>, %arg10: memref<256x128xbf16, #tpu.memory_space<vmem>>, %arg11: memref<1x128xf32, #tpu.memory_space<vmem>>, %arg12: memref<128x128xbf16, #tpu.memory_space<vmem>>, %arg13: memref<1x128xf32, #tpu.memory_space<vmem>>, %arg14: memref<8x128xf32, #tpu.memory_space<vmem>>) attributes {dimension_semantics = [#tpu.dimension_semantics<parallel>], iteration_bounds = array<i64: 1>, scalar_prefetch = 0 : i64, scratch_operands = 0 : i64, tpu.core_type = #tpu.core_type<tc>, window_params = [{transform_indices = @transform_0, window_bounds = array<i64: 8, 64>}, {pipeline_mode = #tpu.pipeline_mode<synchronous>, transform_indices = @transform_1, window_bounds = array<i64: 64, 128>}, {pipeline_mode = #tpu.pipeline_mode<synchronous>, transform_indices = @transform_2, window_bounds = array<i64: 1, 128>}, {pipeline_mode = #tpu.pipeline_mode<synchronous>, transform_indices = @transform_3, window_bounds = array<i64: 128, 128>}, {pipeline_mode = #tpu.pipeline_mode<synchronous>, transform_indices = @transform_4, window_bounds = array<i64: 1, 128>}, {pipeline_mode = #tpu.pipeline_mode<synchronous>, transform_indices = @transform_5, window_bounds = array<i64: 128, 256>}, {pipeline_mode = #tpu.pipeline_mode<synchronous>, transform_indices = @transform_6, window_bounds = array<i64: 1, 256>}, {pipeline_mode = #tpu.pipeline_mode<synchronous>, transform_indices = @transform_7, window_bounds = array<i64: 256, 256>}, {pipeline_mode = #tpu.pipeline_mode<synchronous>, transform_indices = @transform_8, window_bounds = array<i64: 1, 256>}, {pipeline_mode = #tpu.pipeline_mode<synchronous>, transform_indices = @transform_9, window_bounds = array<i64: 256, 128>}, {pipeline_mode = #tpu.pipeline_mode<synchronous>, transform_indices = @transform_10, window_bounds = array<i64: 1, 128>}, {pipeline_mode = #tpu.pipeline_mode<synchronous>, transform_indices = @transform_11, window_bounds = array<i64: 128, 128>}, {pipeline_mode = #tpu.pipeline_mode<synchronous>, transform_indices = @transform_12, window_bounds = array<i64: 1, 128>}, {transform_indices = @transform_13, window_bounds = array<i64: 8, 128>}]} {
    %c0 = arith.constant 0 : index
    %c0_0 = arith.constant 0 : index
    %0 = vector.load %arg1[%c0, %c0_0] : memref<8x64xbf16, #tpu.memory_space<vmem>>, vector<8x64xbf16>
    %c0_1 = arith.constant 0 : index
    %c0_2 = arith.constant 0 : index
    %1 = vector.load %arg2[%c0_1, %c0_2] : memref<64x128xbf16, #tpu.memory_space<vmem>>, vector<64x128xbf16>
    %cst = arith.constant dense<0.000000e+00> : vector<8x128xf32>
    %2 = tpu.matmul %0, %1, %cst {dimension_numbers = #tpu.dot_dimension_numbers<[1], [0], [0], [1], [0, 0, 1, 1], [], []>} : vector<8x64xbf16>, vector<64x128xbf16>, vector<8x128xf32> -> vector<8x128xf32>
    %c0_3 = arith.constant 0 : index
    %c0_4 = arith.constant 0 : index
    %3 = vector.load %arg3[%c0_3, %c0_4] : memref<1x128xf32, #tpu.memory_space<vmem>>, vector<1x128xf32>
    %4 = vector.broadcast %3 : vector<1x128xf32> to vector<8x128xf32>
    %5 = arith.addf %2, %4 : vector<8x128xf32>
    %cst_5 = arith.constant 0.000000e+00 : f32
    %6 = vector.broadcast %cst_5 : f32 to vector<8x128xf32>
    %7 = arith.maximumf %5, %6 : vector<8x128xf32>
    %8 = arith.truncf %7 : vector<8x128xf32> to vector<8x128xbf16>
    %c0_6 = arith.constant 0 : index
    %c0_7 = arith.constant 0 : index
    %9 = vector.load %arg4[%c0_6, %c0_7] : memref<128x128xbf16, #tpu.memory_space<vmem>>, vector<128x128xbf16>
    %cst_8 = arith.constant dense<0.000000e+00> : vector<8x128xf32>
    %10 = tpu.matmul %8, %9, %cst_8 {dimension_numbers = #tpu.dot_dimension_numbers<[1], [0], [0], [1], [0, 0, 1, 1], [], []>} : vector<8x128xbf16>, vector<128x128xbf16>, vector<8x128xf32> -> vector<8x128xf32>
    %c0_9 = arith.constant 0 : index
    %c0_10 = arith.constant 0 : index
    %11 = vector.load %arg5[%c0_9, %c0_10] : memref<1x128xf32, #tpu.memory_space<vmem>>, vector<1x128xf32>
    %12 = vector.broadcast %11 : vector<1x128xf32> to vector<8x128xf32>
    %13 = arith.addf %10, %12 : vector<8x128xf32>
    %cst_11 = arith.constant 0.000000e+00 : f32
    %14 = vector.broadcast %cst_11 : f32 to vector<8x128xf32>
    %15 = arith.maximumf %13, %14 : vector<8x128xf32>
    %16 = arith.addf %7, %15 : vector<8x128xf32>
    %17 = arith.truncf %16 : vector<8x128xf32> to vector<8x128xbf16>
    %c0_12 = arith.constant 0 : index
    %c0_13 = arith.constant 0 : index
    %18 = vector.load %arg6[%c0_12, %c0_13] : memref<128x256xbf16, #tpu.memory_space<vmem>>, vector<128x256xbf16>
    %cst_14 = arith.constant dense<0.000000e+00> : vector<8x256xf32>
    %19 = tpu.matmul %17, %18, %cst_14 {dimension_numbers = #tpu.dot_dimension_numbers<[1], [0], [0], [1], [0, 0, 1, 1], [], []>} : vector<8x128xbf16>, vector<128x256xbf16>, vector<8x256xf32> -> vector<8x256xf32>
    %c0_15 = arith.constant 0 : index
    %c0_16 = arith.constant 0 : index
    %20 = vector.load %arg7[%c0_15, %c0_16] : memref<1x256xf32, #tpu.memory_space<vmem>>, vector<1x256xf32>
    %21 = vector.broadcast %20 : vector<1x256xf32> to vector<8x256xf32>
    %22 = arith.addf %19, %21 : vector<8x256xf32>
    %cst_17 = arith.constant 0.000000e+00 : f32
    %23 = vector.broadcast %cst_17 : f32 to vector<8x256xf32>
    %24 = arith.maximumf %22, %23 : vector<8x256xf32>
    %25 = arith.truncf %24 : vector<8x256xf32> to vector<8x256xbf16>
    %c0_18 = arith.constant 0 : index
    %c0_19 = arith.constant 0 : index
    %26 = vector.load %arg8[%c0_18, %c0_19] : memref<256x256xbf16, #tpu.memory_space<vmem>>, vector<256x256xbf16>
    %cst_20 = arith.constant dense<0.000000e+00> : vector<8x256xf32>
    %27 = tpu.matmul %25, %26, %cst_20 {dimension_numbers = #tpu.dot_dimension_numbers<[1], [0], [0], [1], [0, 0, 1, 1], [], []>} : vector<8x256xbf16>, vector<256x256xbf16>, vector<8x256xf32> -> vector<8x256xf32>
    %c0_21 = arith.constant 0 : index
    %c0_22 = arith.constant 0 : index
    %28 = vector.load %arg9[%c0_21, %c0_22] : memref<1x256xf32, #tpu.memory_space<vmem>>, vector<1x256xf32>
    %29 = vector.broadcast %28 : vector<1x256xf32> to vector<8x256xf32>
    %30 = arith.addf %27, %29 : vector<8x256xf32>
    %cst_23 = arith.constant 0.000000e+00 : f32
    %31 = vector.broadcast %cst_23 : f32 to vector<8x256xf32>
    %32 = arith.maximumf %30, %31 : vector<8x256xf32>
    %33 = arith.addf %24, %32 : vector<8x256xf32>
    %34 = arith.truncf %33 : vector<8x256xf32> to vector<8x256xbf16>
    %c0_24 = arith.constant 0 : index
    %c0_25 = arith.constant 0 : index
    %35 = vector.load %arg10[%c0_24, %c0_25] : memref<256x128xbf16, #tpu.memory_space<vmem>>, vector<256x128xbf16>
    %cst_26 = arith.constant dense<0.000000e+00> : vector<8x128xf32>
    %36 = tpu.matmul %34, %35, %cst_26 {dimension_numbers = #tpu.dot_dimension_numbers<[1], [0], [0], [1], [0, 0, 1, 1], [], []>} : vector<8x256xbf16>, vector<256x128xbf16>, vector<8x128xf32> -> vector<8x128xf32>
    %c0_27 = arith.constant 0 : index
    %c0_28 = arith.constant 0 : index
    %37 = vector.load %arg11[%c0_27, %c0_28] : memref<1x128xf32, #tpu.memory_space<vmem>>, vector<1x128xf32>
    %38 = vector.broadcast %37 : vector<1x128xf32> to vector<8x128xf32>
    %39 = arith.addf %36, %38 : vector<8x128xf32>
    %cst_29 = arith.constant 0.000000e+00 : f32
    %40 = vector.broadcast %cst_29 : f32 to vector<8x128xf32>
    %41 = arith.maximumf %39, %40 : vector<8x128xf32>
    %42 = arith.truncf %41 : vector<8x128xf32> to vector<8x128xbf16>
    %c0_30 = arith.constant 0 : index
    %c0_31 = arith.constant 0 : index
    %43 = vector.load %arg12[%c0_30, %c0_31] : memref<128x128xbf16, #tpu.memory_space<vmem>>, vector<128x128xbf16>
    %cst_32 = arith.constant dense<0.000000e+00> : vector<8x128xf32>
    %44 = tpu.matmul %42, %43, %cst_32 {dimension_numbers = #tpu.dot_dimension_numbers<[1], [0], [0], [1], [0, 0, 1, 1], [], []>} : vector<8x128xbf16>, vector<128x128xbf16>, vector<8x128xf32> -> vector<8x128xf32>
    %c0_33 = arith.constant 0 : index
    %c0_34 = arith.constant 0 : index
    %45 = vector.load %arg13[%c0_33, %c0_34] : memref<1x128xf32, #tpu.memory_space<vmem>>, vector<1x128xf32>
    %46 = vector.broadcast %45 : vector<1x128xf32> to vector<8x128xf32>
    %47 = arith.addf %44, %46 : vector<8x128xf32>
    %cst_35 = arith.constant dense<0xFF800000> : vector<8xf32>
    %48 = vector.multi_reduction <maximumf>, %47, %cst_35 [1] : vector<8x128xf32> to vector<8xf32>
    %49 = vector.shape_cast %48 : vector<8xf32> to vector<8x1xf32>
    %50 = vector.broadcast %49 : vector<8x1xf32> to vector<8x128xf32>
    %51 = arith.subf %47, %50 : vector<8x128xf32>
    %52 = math.exp %51 : vector<8x128xf32>
    %cst_36 = arith.constant dense<0.000000e+00> : vector<8xf32>
    %53 = vector.multi_reduction <add>, %52, %cst_36 [1] : vector<8x128xf32> to vector<8xf32>
    %54 = vector.shape_cast %53 : vector<8xf32> to vector<8x1xf32>
    %55 = math.log %54 : vector<8x1xf32>
    %56 = arith.addf %55, %49 : vector<8x1xf32>
    %57 = vector.broadcast %56 : vector<8x1xf32> to vector<8x128xf32>
    %58 = arith.subf %47, %57 : vector<8x128xf32>
    %c0_37 = arith.constant 0 : index
    %c0_38 = arith.constant 0 : index
    %59 = vector.load %arg14[%c0_37, %c0_38] : memref<8x128xf32, #tpu.memory_space<vmem>>, vector<8x128xf32>
    tpu.vector_store %arg14[%c0_37, %c0_38], %58 {strides = array<i32>} : memref<8x128xf32, #tpu.memory_space<vmem>>, vector<8x128xf32>,
    return
  }
  func.func @transform_0(%arg0: i32) -> (i32, i32) {
    %c0_i32 = arith.constant 0 : i32
    %c0_i32_0 = arith.constant 0 : i32
    return %arg0, %c0_i32 : i32, i32
  }
  func.func @transform_1(%arg0: i32) -> (i32, i32) {
    %c0_i32 = arith.constant 0 : i32
    %c0_i32_0 = arith.constant 0 : i32
    %c0_i32_1 = arith.constant 0 : i32
    return %c0_i32, %c0_i32_0 : i32, i32
  }
  func.func @transform_2(%arg0: i32) -> (i32, i32) {
    %c0_i32 = arith.constant 0 : i32
    %c0_i32_0 = arith.constant 0 : i32
    %c0_i32_1 = arith.constant 0 : i32
    return %c0_i32, %c0_i32_0 : i32, i32
  }
  func.func @transform_3(%arg0: i32) -> (i32, i32) {
    %c0_i32 = arith.constant 0 : i32
    %c0_i32_0 = arith.constant 0 : i32
    %c0_i32_1 = arith.constant 0 : i32
    return %c0_i32, %c0_i32_0 : i32, i32
  }
  func.func @transform_4(%arg0: i32) -> (i32, i32) {
    %c0_i32 = arith.constant 0 : i32
    %c0_i32_0 = arith.constant 0 : i32
    %c0_i32_1 = arith.constant 0 : i32
    return %c0_i32, %c0_i32_0 : i32, i32
  }
  func.func @transform_5(%arg0: i32) -> (i32, i32) {
    %c0_i32 = arith.constant 0 : i32
    %c0_i32_0 = arith.constant 0 : i32
    %c0_i32_1 = arith.constant 0 : i32
    return %c0_i32, %c0_i32_0 : i32, i32
  }
  func.func @transform_6(%arg0: i32) -> (i32, i32) {
    %c0_i32 = arith.constant 0 : i32
    %c0_i32_0 = arith.constant 0 : i32
    %c0_i32_1 = arith.constant 0 : i32
    return %c0_i32, %c0_i32_0 : i32, i32
  }
  func.func @transform_7(%arg0: i32) -> (i32, i32) {
    %c0_i32 = arith.constant 0 : i32
    %c0_i32_0 = arith.constant 0 : i32
    %c0_i32_1 = arith.constant 0 : i32
    return %c0_i32, %c0_i32_0 : i32, i32
  }
  func.func @transform_8(%arg0: i32) -> (i32, i32) {
    %c0_i32 = arith.constant 0 : i32
    %c0_i32_0 = arith.constant 0 : i32
    %c0_i32_1 = arith.constant 0 : i32
    return %c0_i32, %c0_i32_0 : i32, i32
  }
  func.func @transform_9(%arg0: i32) -> (i32, i32) {
    %c0_i32 = arith.constant 0 : i32
    %c0_i32_0 = arith.constant 0 : i32
    %c0_i32_1 = arith.constant 0 : i32
    return %c0_i32, %c0_i32_0 : i32, i32
  }
  func.func @transform_10(%arg0: i32) -> (i32, i32) {
    %c0_i32 = arith.constant 0 : i32
    %c0_i32_0 = arith.constant 0 : i32
    %c0_i32_1 = arith.constant 0 : i32
    return %c0_i32, %c0_i32_0 : i32, i32
  }
  func.func @transform_11(%arg0: i32) -> (i32, i32) {
    %c0_i32 = arith.constant 0 : i32
    %c0_i32_0 = arith.constant 0 : i32
    %c0_i32_1 = arith.constant 0 : i32
    return %c0_i32, %c0_i32_0 : i32, i32
  }
  func.func @transform_12(%arg0: i32) -> (i32, i32) {
    %c0_i32 = arith.constant 0 : i32
    %c0_i32_0 = arith.constant 0 : i32
    %c0_i32_1 = arith.constant 0 : i32
    return %c0_i32, %c0_i32_0 : i32, i32
  }
  func.func @transform_13(%arg0: i32) -> (i32, i32) {
    %c0_i32 = arith.constant 0 : i32
    %c0_i32_0 = arith.constant 0 : i32
    return %arg0, %c0_i32 : i32, i32
  }
}

</mosaic_0001>

<llo_original>
// kernel: _forward_impl.1
$region0: #{_forward_impl.1}
  #allocation0 [shape = 'u32[]', space=smem, size = 0x4, offset = 0x4, fixed_abs, tag = 'smem constant byte address 0x4 - core index']
  #allocation1 [shape = 'u32[144,128]{1,0:T(1,128)}', space=vmem, size = 0x12000, scoped, tag = 'internal scratch']
  %s0 = inlined_call_operand.vmem [shape: bf16[8,64], index: 0, kind: input, shape index: {}]
  %s1 = inlined_call_operand.hbm [shape: bf16[64,128], index: 1, kind: input, shape index: {}]
  %s2 = inlined_call_operand.vmem [shape: f32[1,128], index: 2, kind: input, shape index: {}]
  %s3 = inlined_call_operand.hbm [shape: bf16[128,128], index: 3, kind: input, shape index: {}]
  %s4 = inlined_call_operand.vmem [shape: f32[1,128], index: 4, kind: input, shape index: {}]
  %s5 = inlined_call_operand.hbm [shape: bf16[128,256], index: 5, kind: input, shape index: {}]
  %s6 = inlined_call_operand.vmem [shape: f32[1,256], index: 6, kind: input, shape index: {}]
  %s7 = inlined_call_operand.hbm [shape: bf16[256,256], index: 7, kind: input, shape index: {}]
  %s8 = inlined_call_operand.vmem [shape: f32[1,256], index: 8, kind: input, shape index: {}]
  %s9 = inlined_call_operand.hbm [shape: bf16[256,128], index: 9, kind: input, shape index: {}]
  %s10 = inlined_call_operand.vmem [shape: f32[1,128], index: 10, kind: input, shape index: {}]
  %s11 = inlined_call_operand.hbm [shape: bf16[128,128], index: 11, kind: input, shape index: {}]
  %s12 = inlined_call_operand.vmem [shape: f32[1,128], index: 12, kind: input, shape index: {}]
  %s13 = inlined_call_operand.hbm [shape: f32[8,128], index: 13, kind: output, shape index: {}]
  %s14 = sld [smem:[#allocation0]]
  $region86: #{_forward_impl.1} parent=0
    _
  %s16 = ssub.s32 1, %s14
  %s17 = scalar_select 0, %s16, %s14
  $region1: #{_forward_impl.1} parent=0
    #allocation2 [shape = 'u8[16384]{0}', space=vmem, size = 0x4000, scoped, tag = 'input window, operand 1, single buffered']
    #allocation3 [shape = 's32[1]{0}', space=sflag, size = 0x4, scoped, tag = 'scoped memory for _forward_impl.1']
    #allocation4 [shape = 's32[1]{0}', space=sflag, size = 0x4, scoped, tag = 'scoped memory for _forward_impl.1']
    #allocation5 [shape = 'u8[32768]{0}', space=vmem, size = 0x8000, scoped, tag = 'input window, operand 3, single buffered']
    #allocation6 [shape = 's32[1]{0}', space=sflag, size = 0x4, scoped, tag = 'scoped memory for _forward_impl.1']
    #allocation7 [shape = 'u8[65536]{0}', space=vmem, size = 0x10000, scoped, tag = 'input window, operand 5, single buffered']
    #allocation8 [shape = 'u8[131072]{0}', space=vmem, size = 0x20000, scoped, tag = 'input window, operand 7, single buffered']
    #allocation9 [shape = 's32[1]{0}', space=sflag, size = 0x4, scoped, tag = 'scoped memory for _forward_impl.1']
    #allocation10 [shape = 'u8[65536]{0}', space=vmem, size = 0x10000, scoped, tag = 'input window, operand 9, single buffered']
    #allocation11 [shape = 'u8[32768]{0}', space=vmem, size = 0x8000, scoped, tag = 'input window, operand 11, single buffered']
    #allocation12 [shape = 's32[1]{0}', space=sflag, size = 0x4, scoped, tag = 'scoped memory for _forward_impl.1']
    #allocation13 [shape = 'u8[4096]{0}', space=vmem, size = 0x1000, scoped, tag = 'output window, operand 0, single buffered']
    %18 = vsyncpa [#allocation3], 0
    %19 = vsyncpa [#allocation6], 0
    %20 = vsyncpa [#allocation9], 0
    %21 = vsyncpa [#allocation12], 0
    %22 = vsyncpa [#allocation4], 0
    // Predicated region
    $region2: #{_forward_impl.1} parent=1 // pred_check
      _
    $region3: #{_forward_impl.1} parent=1 // pred_check_branch
      %24 = sbr.rel (0) target = $region5
    $region4: #{_forward_impl.1} parent=1 // pred_region
      _
    $region5: #{_forward_impl.1} parent=1 // pred_fallthru
      _
    // Predicated region
    $region6: #{_forward_impl.1} parent=1 // pred_check
      _
    $region7: #{_forward_impl.1} parent=1 // pred_check_branch
      %26 = sbr.rel (0) target = $region9
    $region8: #{_forward_impl.1} parent=1 // pred_region
      %s28 = ssub.s32 512, 512
      %29 = vsyncadd [#allocation3], %s28
      %s30 = sshll.u32 [#allocation2], 4
      %s31 = int_to_ptr.vmem [resolvable:$true] %s30
      %36 = dma.hbm_to_vmem [thread:$0]  %s1, 512, %s31, [#allocation3], 64, 64, 4
    $region9: #{_forward_impl.1} parent=1 // pred_fallthru
      _
    // Predicated region
    $region10: #{_forward_impl.1} parent=1 // pred_check
      _
    $region11: #{_forward_impl.1} parent=1 // pred_check_branch
      %38 = sbr.rel (0) target = $region13
    $region12: #{_forward_impl.1} parent=1 // pred_region
      _
    $region13: #{_forward_impl.1} parent=1 // pred_fallthru
      _
    // Predicated region
    $region14: #{_forward_impl.1} parent=1 // pred_check
      _
    $region15: #{_forward_impl.1} parent=1 // pred_check_branch
      %40 = sbr.rel (0) target = $region17
    $region16: #{_forward_impl.1} parent=1 // pred_region
      %s42 = ssub.s32 1024, 1024
      %43 = vsyncadd [#allocation6], %s42
      %s44 = sshll.u32 [#allocation5], 4
      %s45 = int_to_ptr.vmem [resolvable:$true] %s44
      %50 = dma.hbm_to_vmem [thread:$0]  %s3, 1024, %s45, [#allocation6], 64, 64, 4
    $region17: #{_forward_impl.1} parent=1 // pred_fallthru
      _
    // Predicated region
    $region18: #{_forward_impl.1} parent=1 // pred_check
      _
    $region19: #{_forward_impl.1} parent=1 // pred_check_branch
      %52 = sbr.rel (0) target = $region21
    $region20: #{_forward_impl.1} parent=1 // pred_region
      _
    $region21: #{_forward_impl.1} parent=1 // pred_fallthru
      _
    // Predicated region
    $region22: #{_forward_impl.1} parent=1 // pred_check
      _
    $region23: #{_forward_impl.1} parent=1 // pred_check_branch
      %54 = sbr.rel (0) target = $region25
    $region24: #{_forward_impl.1} parent=1 // pred_region
      %s56 = ssub.s32 2048, 2048
      %57 = vsyncadd [#allocation6], %s56
      %s58 = sshll.u32 [#allocation7], 4
      %s59 = int_to_ptr.vmem [resolvable:$true] %s58
      %64 = dma.hbm_to_vmem [thread:$0]  %s5, 2048, %s59, [#allocation6], 128, 128, 8
    $region25: #{_forward_impl.1} parent=1 // pred_fallthru
      _
    // Predicated region
    $region26: #{_forward_impl.1} parent=1 // pred_check
      _
    $region27: #{_forward_impl.1} parent=1 // pred_check_branch
      %66 = sbr.rel (0) target = $region29
    $region28: #{_forward_impl.1} parent=1 // pred_region
      _
    $region29: #{_forward_impl.1} parent=1 // pred_fallthru
      _
    // Predicated region
    $region30: #{_forward_impl.1} parent=1 // pred_check
      _
    $region31: #{_forward_impl.1} parent=1 // pred_check_branch
      %68 = sbr.rel (0) target = $region33
    $region32: #{_forward_impl.1} parent=1 // pred_region
      %s70 = ssub.s32 4096, 4096
      %71 = vsyncadd [#allocation9], %s70
      %s72 = sshll.u32 [#allocation8], 4
      %s73 = int_to_ptr.vmem [resolvable:$true] %s72
      %78 = dma.hbm_to_vmem [thread:$0]  %s7, 4096, %s73, [#allocation9], 128, 128, 8
    $region33: #{_forward_impl.1} parent=1 // pred_fallthru
      _
    // Predicated region
    $region34: #{_forward_impl.1} parent=1 // pred_check
      _
    $region35: #{_forward_impl.1} parent=1 // pred_check_branch
      %80 = sbr.rel (0) target = $region37
    $region36: #{_forward_impl.1} parent=1 // pred_region
      _
    $region37: #{_forward_impl.1} parent=1 // pred_fallthru
      _
    // Predicated region
    $region38: #{_forward_impl.1} parent=1 // pred_check
      _
    $region39: #{_forward_impl.1} parent=1 // pred_check_branch
      %82 = sbr.rel (0) target = $region41
    $region40: #{_forward_impl.1} parent=1 // pred_region
      %s84 = ssub.s32 2048, 2048
      %85 = vsyncadd [#allocation9], %s84
      %s86 = sshll.u32 [#allocation10], 4
      %s87 = int_to_ptr.vmem [resolvable:$true] %s86
      %92 = dma.hbm_to_vmem [thread:$0]  %s9, 2048, %s87, [#allocation9], 64, 64, 4
    $region41: #{_forward_impl.1} parent=1 // pred_fallthru
      _
    // Predicated region
    $region42: #{_forward_impl.1} parent=1 // pred_check
      _
    $region43: #{_forward_impl.1} parent=1 // pred_check_branch
      %94 = sbr.rel (0) target = $region45
    $region44: #{_forward_impl.1} parent=1 // pred_region
      _
    $region45: #{_forward_impl.1} parent=1 // pred_fallthru
      _
    // Predicated region
    $region46: #{_forward_impl.1} parent=1 // pred_check
      _
    $region47: #{_forward_impl.1} parent=1 // pred_check_branch
      %96 = sbr.rel (0) target = $region49
    $region48: #{_forward_impl.1} parent=1 // pred_region
      %s98 = ssub.s32 1024, 1024
      %99 = vsyncadd [#allocation12], %s98
      %s100 = sshll.u32 [#allocation11], 4
      %s101 = int_to_ptr.vmem [resolvable:$true] %s100
      %106 = dma.hbm_to_vmem [thread:$0]  %s11, 1024, %s101, [#allocation12], 64, 64, 4
    $region49: #{_forward_impl.1} parent=1 // pred_fallthru
      _
    // Predicated region
    $region50: #{_forward_impl.1} parent=1 // pred_check
      _
    $region51: #{_forward_impl.1} parent=1 // pred_check_branch
      %108 = sbr.rel (0) target = $region53
    $region52: #{_forward_impl.1} parent=1 // pred_region
      _
    $region53: #{_forward_impl.1} parent=1 // pred_fallthru
      _
    // Predicated region
    $region54: #{_forward_impl.1} parent=1 // pred_check
      _
    $region55: #{_forward_impl.1} parent=1 // pred_check_branch
      %110 = sbr.rel (0) target = $region57
    $region56: #{_forward_impl.1} parent=1 // pred_region
      %111 = dma.done [#allocation3], 512
    $region57: #{_forward_impl.1} parent=1 // pred_fallthru
      _
    // Predicated region
    $region58: #{_forward_impl.1} parent=1 // pred_check
      _
    $region59: #{_forward_impl.1} parent=1 // pred_check_branch
      %113 = sbr.rel (0) target = $region61
    $region60: #{_forward_impl.1} parent=1 // pred_region
      %114 = dma.done [#allocation6], 1024
    $region61: #{_forward_impl.1} parent=1 // pred_fallthru
      _
    // Predicated region
    $region62: #{_forward_impl.1} parent=1 // pred_check
      _
    $region63: #{_forward_impl.1} parent=1 // pred_check_branch
      %116 = sbr.rel (0) target = $region65
    $region64: #{_forward_impl.1} parent=1 // pred_region
      %117 = dma.done [#allocation6], 2048
    $region65: #{_forward_impl.1} parent=1 // pred_fallthru
      _
    // Predicated region
    $region66: #{_forward_impl.1} parent=1 // pred_check
      _
    $region67: #{_forward_impl.1} parent=1 // pred_check_branch
      %119 = sbr.rel (0) target = $region69
    $region68: #{_forward_impl.1} parent=1 // pred_region
      %120 = dma.done [#allocation9], 4096
    $region69: #{_forward_impl.1} parent=1 // pred_fallthru
      _
    // Predicated region
    $region70: #{_forward_impl.1} parent=1 // pred_check
      _
    $region71: #{_forward_impl.1} parent=1 // pred_check_branch
      %122 = sbr.rel (0) target = $region73
    $region72: #{_forward_impl.1} parent=1 // pred_region
      %123 = dma.done [#allocation9], 2048
    $region73: #{_forward_impl.1} parent=1 // pred_fallthru
      _
    // Predicated region
    $region74: #{_forward_impl.1} parent=1 // pred_check
      _
    $region75: #{_forward_impl.1} parent=1 // pred_check_branch
      %125 = sbr.rel (0) target = $region77
    $region76: #{_forward_impl.1} parent=1 // pred_region
      %126 = dma.done [#allocation12], 1024
    $region77: #{_forward_impl.1} parent=1 // pred_fallthru
      _
    %v128 = vld [vmem:[%s0] sm:$0xf]
    %v129 = vld [vmem:[#allocation2] sm:$0xf]
    %v130 = vld [vmem:[#allocation2 + $0x4] sm:$0xf]
    %v131 = vld [vmem:[#allocation2 + $0x8] sm:$0xf]
    %v132 = vld [vmem:[#allocation2 + $0xc] sm:$0xf]
    %v133 = vld [vmem:[#allocation2 + $0x10] sm:$0xf]
    %v134 = vld [vmem:[#allocation2 + $0x14] sm:$0xf]
    %v135 = vld [vmem:[#allocation2 + $0x18] sm:$0xf]
    %v136 = vld [vmem:[#allocation2 + $0x1c] sm:$0xf]
    %v137 = vld [vmem:[%s2] sm:$0x1]
    %v139 = vlaneseq
    %v140 = vshrl.u32 %v139, 7
    %v141 = vsub.s32 0, %v140
    %v142 = vrot.slane %v137, %v141
    %v152 = vunpack.c.l.b16 %v129
    %v153 = vunpack.c.l.b16 %v130
    %v154 = vunpack.c.l.b16 %v131
    %v155 = vunpack.c.l.b16 %v132
    %v156 = vunpack.c.l.b16 %v133
    %v157 = vunpack.c.l.b16 %v134
    %v158 = vunpack.c.l.b16 %v135
    %v159 = vunpack.c.l.b16 %v136
    %v160 = vpack.c.b16 %v153, %v152
    %v161 = vpack.c.b16 %v155, %v154
    %v162 = vpack.c.b16 %v157, %v156
    %v163 = vpack.c.b16 %v159, %v158
    %vm168 = vcmask 523264
    %v170 = vsel %vm168, %v128, 0
    %172 = vmatprep.subr.bf16.mxu0 0
    %173 = vmatpush1.bf16.msra.mxu0 0
    %174 = vmatprep.subr.bf16.mxu0 0
    %175 = vmatpush1.bf16.msra.mxu0 0
    %176 = vmatprep.subr.bf16.mxu0 0
    %177 = vmatpush1.bf16.msra.mxu0 0
    %178 = vmatprep.subr.bf16.mxu0 0
    %179 = vmatpush1.bf16.msra.mxu0 0
    %180 = vmatprep.subr.bf16.mxu0 0
    %181 = vmatpush1.bf16.msra.mxu0 %v163
    %182 = vmatprep.subr.bf16.mxu0 0
    %183 = vmatpush1.bf16.msra.mxu0 %v162
    %184 = vmatprep.subr.bf16.mxu0 0
    %185 = vmatpush1.bf16.msra.mxu0 %v161
    %186 = vmatprep.subr.bf16.mxu0 0
    %187 = vmatpush1.bf16.msra.mxu0 %v160
    %188 = vmatprep.subr.bf16.mxu0 0
    %189 = vmatpush2.bf16.msra.mxu0 0
    %190 = vmatprep.subr.bf16.mxu0 0
    %191 = vmatpush2.bf16.msra.mxu0 0
    %192 = vmatprep.subr.bf16.mxu0 0
    %193 = vmatpush2.bf16.msra.mxu0 0
    %194 = vmatprep.subr.bf16.mxu0 0
    %195 = vmatpush2.bf16.msra.mxu0 0
    %196 = vmatprep.subr.bf16.mxu0 0
    %197 = vmatpush2.bf16.msra.mxu0 0
    %198 = vmatprep.subr.bf16.mxu0 0
    %199 = vmatpush2.bf16.msra.mxu0 0
    %200 = vmatprep.subr.bf16.mxu0 0
    %201 = vmatpush2.bf16.msra.mxu0 0
    %202 = vmatprep.subr.bf16.mxu0 0
    %203 = vmatpush2.bf16.msra.mxu0 0
    %204 = vmatprep.mubr.bf16.mxu0 0
    %205 = vmatmul.mubr.bf16.gmra.mxu0 %v170
    %v206 = vpop.f32.mrf.mxu0
    %v207 = vadd.f32 %v142, %v206
    %v208 = vpop.f32.mrf.mxu0
    %v209 = vpop.f32.mrf.mxu0
    %v210 = vpop.f32.mrf.mxu0
    %211 = vdwg.mxu0
    %v212 = vmax.f32 %v207, 0.0
    %v213 = vpack.c.bf16 %v212, %v212
    %v214 = vld [vmem:[#allocation5] sm:$0xf]
    %v215 = vld [vmem:[#allocation5 + $0x4] sm:$0xf]
    %v216 = vld [vmem:[#allocation5 + $0x8] sm:$0xf]
    %v217 = vld [vmem:[#allocation5 + $0xc] sm:$0xf]
    %v218 = vld [vmem:[#allocation5 + $0x10] sm:$0xf]
    %v219 = vld [vmem:[#allocation5 + $0x14] sm:$0xf]
    %v220 = vld [vmem:[#allocation5 + $0x18] sm:$0xf]
    %v221 = vld [vmem:[#allocation5 + $0x1c] sm:$0xf]
    %v222 = vld [vmem:[#allocation5 + $0x20] sm:$0xf]
    %v223 = vld [vmem:[#allocation5 + $0x24] sm:$0xf]
    %v224 = vld [vmem:[#allocation5 + $0x28] sm:$0xf]
    %v225 = vld [vmem:[#allocation5 + $0x2c] sm:$0xf]
    %v226 = vld [vmem:[#allocation5 + $0x30] sm:$0xf]
    %v227 = vld [vmem:[#allocation5 + $0x34] sm:$0xf]
    %v228 = vld [vmem:[#allocation5 + $0x38] sm:$0xf]
    %v229 = vld [vmem:[#allocation5 + $0x3c] sm:$0xf]
    %v230 = vld [vmem:[%s4] sm:$0x1]
    %v232 = vlaneseq
    %v233 = vshrl.u32 %v232, 7
    %v234 = vsub.s32 0, %v233
    %v235 = vrot.slane %v230, %v234
    %v253 = vunpack.c.l.b16 %v214
    %v254 = vunpack.c.l.b16 %v215
    %v255 = vunpack.c.l.b16 %v216
    %v256 = vunpack.c.l.b16 %v217
    %v257 = vunpack.c.l.b16 %v218
    %v258 = vunpack.c.l.b16 %v219
    %v259 = vunpack.c.l.b16 %v220
    %v260 = vunpack.c.l.b16 %v221
    %v261 = vunpack.c.l.b16 %v222
    %v262 = vunpack.c.l.b16 %v223
    %v263 = vunpack.c.l.b16 %v224
    %v264 = vunpack.c.l.b16 %v225
    %v265 = vunpack.c.l.b16 %v226
    %v266 = vunpack.c.l.b16 %v227
    %v267 = vunpack.c.l.b16 %v228
    %v268 = vunpack.c.l.b16 %v229
    %v269 = vpack.c.b16 %v254, %v253
    %v270 = vpack.c.b16 %v256, %v255
    %v271 = vpack.c.b16 %v258, %v257
    %v272 = vpack.c.b16 %v260, %v259
    %v273 = vpack.c.b16 %v262, %v261
    %v274 = vpack.c.b16 %v264, %v263
    %v275 = vpack.c.b16 %v266, %v265
    %v276 = vpack.c.b16 %v268, %v267
    %285 = vmatprep.subr.bf16.mxu0 0
    %286 = vmatpush1.bf16.msra.mxu0 %v276
    %287 = vmatprep.subr.bf16.mxu0 0
    %288 = vmatpush1.bf16.msra.mxu0 %v275
    %289 = vmatprep.subr.bf16.mxu0 0
    %290 = vmatpush1.bf16.msra.mxu0 %v274
    %291 = vmatprep.subr.bf16.mxu0 0
    %292 = vmatpush1.bf16.msra.mxu0 %v273
    %293 = vmatprep.subr.bf16.mxu0 0
    %294 = vmatpush1.bf16.msra.mxu0 %v272
    %295 = vmatprep.subr.bf16.mxu0 0
    %296 = vmatpush1.bf16.msra.mxu0 %v271
    %297 = vmatprep.subr.bf16.mxu0 0
    %298 = vmatpush1.bf16.msra.mxu0 %v270
    %299 = vmatprep.subr.bf16.mxu0 0
    %300 = vmatpush1.bf16.msra.mxu0 %v269
    %301 = vmatprep.subr.bf16.mxu0 0
    %302 = vmatpush2.bf16.msra.mxu0 0
    %303 = vmatprep.subr.bf16.mxu0 0
    %304 = vmatpush2.bf16.msra.mxu0 0
    %305 = vmatprep.subr.bf16.mxu0 0
    %306 = vmatpush2.bf16.msra.mxu0 0
    %307 = vmatprep.subr.bf16.mxu0 0
    %308 = vmatpush2.bf16.msra.mxu0 0
    %309 = vmatprep.subr.bf16.mxu0 0
    %310 = vmatpush2.bf16.msra.mxu0 0
    %311 = vmatprep.subr.bf16.mxu0 0
    %312 = vmatpush2.bf16.msra.mxu0 0
    %313 = vmatprep.subr.bf16.mxu0 0
    %314 = vmatpush2.bf16.msra.mxu0 0
    %315 = vmatprep.subr.bf16.mxu0 0
    %316 = vmatpush2.bf16.msra.mxu0 0
    %317 = vmatprep.mubr.bf16.mxu0 0
    %318 = vmatmul.mubr.bf16.gmra.mxu0 %v213
    %v319 = vpop.f32.mrf.mxu0
    %v320 = vadd.f32 %v235, %v319
    %v321 = vpop.f32.mrf.mxu0
    %v322 = vpop.f32.mrf.mxu0
    %v323 = vpop.f32.mrf.mxu0
    %324 = vdwg.mxu0
    %v325 = vmax.f32 %v320, 0.0
    %v326 = vadd.f32 %v212, %v325
    %v327 = vpack.c.bf16 %v326, %v326
    %v328 = vld [vmem:[#allocation7] sm:$0xff]
    %v329 = vld [vmem:[#allocation7 + $0x8] sm:$0xff]
    %v330 = vld [vmem:[#allocation7 + $0x10] sm:$0xff]
    %v331 = vld [vmem:[#allocation7 + $0x18] sm:$0xff]
    %v332 = vld [vmem:[#allocation7 + $0x20] sm:$0xff]
    %v333 = vld [vmem:[#allocation7 + $0x28] sm:$0xff]
    %v334 = vld [vmem:[#allocation7 + $0x30] sm:$0xff]
    %v335 = vld [vmem:[#allocation7 + $0x38] sm:$0xff]
    %v336 = vld [vmem:[#allocation7 + $0x40] sm:$0xff]
    %v337 = vld [vmem:[#allocation7 + $0x48] sm:$0xff]
    %v338 = vld [vmem:[#allocation7 + $0x50] sm:$0xff]
    %v339 = vld [vmem:[#allocation7 + $0x58] sm:$0xff]
    %v340 = vld [vmem:[#allocation7 + $0x60] sm:$0xff]
    %v341 = vld [vmem:[#allocation7 + $0x68] sm:$0xff]
    %v342 = vld [vmem:[#allocation7 + $0x70] sm:$0xff]
    %v343 = vld [vmem:[#allocation7 + $0x78] sm:$0xff]
    %v344 = vld [vmem:[%s6] sm:$0x3]
    %v346 = vlaneseq
    %v347 = vshrl.u32 %v346, 7
    %v348 = vsub.s32 0, %v347
    %v349 = vrot.slane %v344, %v348
    %v350 = vlaneseq
    %v351 = vshrl.u32 %v350, 7
    %v352 = vsub.s32 1, %v351
    %v353 = vrot.slane %v344, %v352
    %v372 = vunpack.c.l.b16 %v328
    %v373 = vunpack.c.h.b16 %v328
    %v374 = vunpack.c.l.b16 %v329
    %v375 = vunpack.c.h.b16 %v329
    %v376 = vunpack.c.l.b16 %v330
    %v377 = vunpack.c.h.b16 %v330
    %v378 = vunpack.c.l.b16 %v331
    %v379 = vunpack.c.h.b16 %v331
    %v380 = vunpack.c.l.b16 %v332
    %v381 = vunpack.c.h.b16 %v332
    %v382 = vunpack.c.l.b16 %v333
    %v383 = vunpack.c.h.b16 %v333
    %v384 = vunpack.c.l.b16 %v334
    %v385 = vunpack.c.h.b16 %v334
    %v386 = vunpack.c.l.b16 %v335
    %v387 = vunpack.c.h.b16 %v335
    %v388 = vunpack.c.l.b16 %v336
    %v389 = vunpack.c.h.b16 %v336
    %v390 = vunpack.c.l.b16 %v337
    %v391 = vunpack.c.h.b16 %v337
    %v392 = vunpack.c.l.b16 %v338
    %v393 = vunpack.c.h.b16 %v338
    %v394 = vunpack.c.l.b16 %v339
    %v395 = vunpack.c.h.b16 %v339
    %v396 = vunpack.c.l.b16 %v340
    %v397 = vunpack.c.h.b16 %v340
    %v398 = vunpack.c.l.b16 %v341
    %v399 = vunpack.c.h.b16 %v341
    %v400 = vunpack.c.l.b16 %v342
    %v401 = vunpack.c.h.b16 %v342
    %v402 = vunpack.c.l.b16 %v343
    %v403 = vunpack.c.h.b16 %v343
    %v404 = vpack.c.b16 %v374, %v372
    %v405 = vpack.c.b16 %v375, %v373
    %v406 = vpack.c.b16 %v378, %v376
    %v407 = vpack.c.b16 %v379, %v377
    %v408 = vpack.c.b16 %v382, %v380
    %v409 = vpack.c.b16 %v383, %v381
    %v410 = vpack.c.b16 %v386, %v384
    %v411 = vpack.c.b16 %v387, %v385
    %v412 = vpack.c.b16 %v390, %v388
    %v413 = vpack.c.b16 %v391, %v389
    %v414 = vpack.c.b16 %v394, %v392
    %v415 = vpack.c.b16 %v395, %v393
    %v416 = vpack.c.b16 %v398, %v396
    %v417 = vpack.c.b16 %v399, %v397
    %v418 = vpack.c.b16 %v402, %v400
    %v419 = vpack.c.b16 %v403, %v401
    %436 = vmatprep.subr.bf16.mxu0 %v419
    %437 = vmatpush1.bf16.msra.mxu0 %v418
    %438 = vmatprep.subr.bf16.mxu0 %v417
    %439 = vmatpush1.bf16.msra.mxu0 %v416
    %440 = vmatprep.subr.bf16.mxu0 %v415
    %441 = vmatpush1.bf16.msra.mxu0 %v414
    %442 = vmatprep.subr.bf16.mxu0 %v413
    %443 = vmatpush1.bf16.msra.mxu0 %v412
    %444 = vmatprep.subr.bf16.mxu0 %v411
    %445 = vmatpush1.bf16.msra.mxu0 %v410
    %446 = vmatprep.subr.bf16.mxu0 %v409
    %447 = vmatpush1.bf16.msra.mxu0 %v408
    %448 = vmatprep.subr.bf16.mxu0 %v407
    %449 = vmatpush1.bf16.msra.mxu0 %v406
    %450 = vmatprep.subr.bf16.mxu0 %v405
    %451 = vmatpush1.bf16.msra.mxu0 %v404
    %452 = vmatprep.subr.bf16.mxu0 0
    %453 = vmatpush2.bf16.msra.mxu0 0
    %454 = vmatprep.subr.bf16.mxu0 0
    %455 = vmatpush2.bf16.msra.mxu0 0
    %456 = vmatprep.subr.bf16.mxu0 0
    %457 = vmatpush2.bf16.msra.mxu0 0
    %458 = vmatprep.subr.bf16.mxu0 0
    %459 = vmatpush2.bf16.msra.mxu0 0
    %460 = vmatprep.subr.bf16.mxu0 0
    %461 = vmatpush2.bf16.msra.mxu0 0
    %462 = vmatprep.subr.bf16.mxu0 0
    %463 = vmatpush2.bf16.msra.mxu0 0
    %464 = vmatprep.subr.bf16.mxu0 0
    %465 = vmatpush2.bf16.msra.mxu0 0
    %466 = vmatprep.subr.bf16.mxu0 0
    %467 = vmatpush2.bf16.msra.mxu0 0
    %468 = vmatprep.mubr.bf16.mxu0 0
    %469 = vmatmul.mubr.bf16.gmra.mxu0 %v327
    %v470 = vpop.f32.mrf.mxu0
    %v471 = vadd.f32 %v349, %v470
    %v472 = vpop.f32.mrf.mxu0
    %v473 = vadd.f32 %v353, %v472
    %v474 = vpop.f32.mrf.mxu0
    %v475 = vpop.f32.mrf.mxu0
    %476 = vdwg.mxu0
    %v477 = vmax.f32 %v471, 0.0
    %v478 = vmax.f32 %v473, 0.0
    %v479 = vpack.c.bf16 %v477, %v477
    %v480 = vpack.c.bf16 %v478, %v478
    %v481 = vld [vmem:[#allocation8] sm:$0xff]
    %v482 = vld [vmem:[#allocation8 + $0x8] sm:$0xff]
    %v483 = vld [vmem:[#allocation8 + $0x10] sm:$0xff]
    %v484 = vld [vmem:[#allocation8 + $0x18] sm:$0xff]
    %v485 = vld [vmem:[#allocation8 + $0x20] sm:$0xff]
    %v486 = vld [vmem:[#allocation8 + $0x28] sm:$0xff]
    %v487 = vld [vmem:[#allocation8 + $0x30] sm:$0xff]
    %v488 = vld [vmem:[#allocation8 + $0x38] sm:$0xff]
    %v489 = vld [vmem:[#allocation8 + $0x40] sm:$0xff]
    %v490 = vld [vmem:[#allocation8 + $0x48] sm:$0xff]
    %v491 = vld [vmem:[#allocation8 + $0x50] sm:$0xff]
    %v492 = vld [vmem:[#allocation8 + $0x58] sm:$0xff]
    %v493 = vld [vmem:[#allocation8 + $0x60] sm:$0xff]
    %v494 = vld [vmem:[#allocation8 + $0x68] sm:$0xff]
    %v495 = vld [vmem:[#allocation8 + $0x70] sm:$0xff]
    %v496 = vld [vmem:[#allocation8 + $0x78] sm:$0xff]
    %v497 = vld [vmem:[#allocation8 + $0x80] sm:$0xff]
    %v498 = vld [vmem:[#allocation8 + $0x88] sm:$0xff]
    %v499 = vld [vmem:[#allocation8 + $0x90] sm:$0xff]
    %v500 = vld [vmem:[#allocation8 + $0x98] sm:$0xff]
    %v501 = vld [vmem:[#allocation8 + $0xa0] sm:$0xff]
    %v502 = vld [vmem:[#allocation8 + $0xa8] sm:$0xff]
    %v503 = vld [vmem:[#allocation8 + $0xb0] sm:$0xff]
    %v504 = vld [vmem:[#allocation8 + $0xb8] sm:$0xff]
    %v505 = vld [vmem:[#allocation8 + $0xc0] sm:$0xff]
    %v506 = vld [vmem:[#allocation8 + $0xc8] sm:$0xff]
    %v507 = vld [vmem:[#allocation8 + $0xd0] sm:$0xff]
    %v508 = vld [vmem:[#allocation8 + $0xd8] sm:$0xff]
    %v509 = vld [vmem:[#allocation8 + $0xe0] sm:$0xff]
    %v510 = vld [vmem:[#allocation8 + $0xe8] sm:$0xff]
    %v511 = vld [vmem:[#allocation8 + $0xf0] sm:$0xff]
    %v512 = vld [vmem:[#allocation8 + $0xf8] sm:$0xff]
    %v513 = vld [vmem:[%s8] sm:$0x3]
    %v515 = vlaneseq
    %v516 = vshrl.u32 %v515, 7
    %v517 = vsub.s32 0, %v516
    %v518 = vrot.slane %v513, %v517
    %v519 = vlaneseq
    %v520 = vshrl.u32 %v519, 7
    %v521 = vsub.s32 1, %v520
    %v522 = vrot.slane %v513, %v521
    %v557 = vunpack.c.l.b16 %v481
    %v558 = vunpack.c.h.b16 %v481
    %v559 = vunpack.c.l.b16 %v482
    %v560 = vunpack.c.h.b16 %v482
    %v561 = vunpack.c.l.b16 %v483
    %v562 = vunpack.c.h.b16 %v483
    %v563 = vunpack.c.l.b16 %v484
    %v564 = vunpack.c.h.b16 %v484
    %v565 = vunpack.c.l.b16 %v485
    %v566 = vunpack.c.h.b16 %v485
    %v567 = vunpack.c.l.b16 %v486
    %v568 = vunpack.c.h.b16 %v486
    %v569 = vunpack.c.l.b16 %v487
    %v570 = vunpack.c.h.b16 %v487
    %v571 = vunpack.c.l.b16 %v488
    %v572 = vunpack.c.h.b16 %v488
    %v573 = vunpack.c.l.b16 %v489
    %v574 = vunpack.c.h.b16 %v489
    %v575 = vunpack.c.l.b16 %v490
    %v576 = vunpack.c.h.b16 %v490
    %v577 = vunpack.c.l.b16 %v491
    %v578 = vunpack.c.h.b16 %v491
    %v579 = vunpack.c.l.b16 %v492
    %v580 = vunpack.c.h.b16 %v492
    %v581 = vunpack.c.l.b16 %v493
    %v582 = vunpack.c.h.b16 %v493
    %v583 = vunpack.c.l.b16 %v494
    %v584 = vunpack.c.h.b16 %v494
    %v585 = vunpack.c.l.b16 %v495
    %v586 = vunpack.c.h.b16 %v495
    %v587 = vunpack.c.l.b16 %v496
    %v588 = vunpack.c.h.b16 %v496
    %v589 = vunpack.c.l.b16 %v497
    %v590 = vunpack.c.h.b16 %v497
    %v591 = vunpack.c.l.b16 %v498
    %v592 = vunpack.c.h.b16 %v498
    %v593 = vunpack.c.l.b16 %v499
    %v594 = vunpack.c.h.b16 %v499
    %v595 = vunpack.c.l.b16 %v500
    %v596 = vunpack.c.h.b16 %v500
    %v597 = vunpack.c.l.b16 %v501
    %v598 = vunpack.c.h.b16 %v501
    %v599 = vunpack.c.l.b16 %v502
    %v600 = vunpack.c.h.b16 %v502
    %v601 = vunpack.c.l.b16 %v503
    %v602 = vunpack.c.h.b16 %v503
    %v603 = vunpack.c.l.b16 %v504
    %v604 = vunpack.c.h.b16 %v504
    %v605 = vunpack.c.l.b16 %v505
    %v606 = vunpack.c.h.b16 %v505
    %v607 = vunpack.c.l.b16 %v506
    %v608 = vunpack.c.h.b16 %v506
    %v609 = vunpack.c.l.b16 %v507
    %v610 = vunpack.c.h.b16 %v507
    %v611 = vunpack.c.l.b16 %v508
    %v612 = vunpack.c.h.b16 %v508
    %v613 = vunpack.c.l.b16 %v509
    %v614 = vunpack.c.h.b16 %v509
    %v615 = vunpack.c.l.b16 %v510
    %v616 = vunpack.c.h.b16 %v510
    %v617 = vunpack.c.l.b16 %v511
    %v618 = vunpack.c.h.b16 %v511
    %v619 = vunpack.c.l.b16 %v512
    %v620 = vunpack.c.h.b16 %v512
    %v621 = vpack.c.b16 %v559, %v557
    %v622 = vpack.c.b16 %v560, %v558
    %v623 = vpack.c.b16 %v563, %v561
    %v624 = vpack.c.b16 %v564, %v562
    %v625 = vpack.c.b16 %v567, %v565
    %v626 = vpack.c.b16 %v568, %v566
    %v627 = vpack.c.b16 %v571, %v569
    %v628 = vpack.c.b16 %v572, %v570
    %v629 = vpack.c.b16 %v575, %v573
    %v630 = vpack.c.b16 %v576, %v574
    %v631 = vpack.c.b16 %v579, %v577
    %v632 = vpack.c.b16 %v580, %v578
    %v633 = vpack.c.b16 %v583, %v581
    %v634 = vpack.c.b16 %v584, %v582
    %v635 = vpack.c.b16 %v587, %v585
    %v636 = vpack.c.b16 %v588, %v586
    %v637 = vpack.c.b16 %v591, %v589
    %v638 = vpack.c.b16 %v592, %v590
    %v639 = vpack.c.b16 %v595, %v593
    %v640 = vpack.c.b16 %v596, %v594
    %v641 = vpack.c.b16 %v599, %v597
    %v642 = vpack.c.b16 %v600, %v598
    %v643 = vpack.c.b16 %v603, %v601
    %v644 = vpack.c.b16 %v604, %v602
    %v645 = vpack.c.b16 %v607, %v605
    %v646 = vpack.c.b16 %v608, %v606
    %v647 = vpack.c.b16 %v611, %v609
    %v648 = vpack.c.b16 %v612, %v610
    %v649 = vpack.c.b16 %v615, %v613
    %v650 = vpack.c.b16 %v616, %v614
    %v651 = vpack.c.b16 %v619, %v617
    %v652 = vpack.c.b16 %v620, %v618
    %685 = vmatprep.subr.bf16.mxu0 %v636
    %686 = vmatpush1.bf16.msra.mxu0 %v635
    %687 = vmatprep.subr.bf16.mxu0 %v634
    %688 = vmatpush1.bf16.msra.mxu0 %v633
    %689 = vmatprep.subr.bf16.mxu0 %v632
    %690 = vmatpush1.bf16.msra.mxu0 %v631
    %691 = vmatprep.subr.bf16.mxu0 %v630
    %692 = vmatpush1.bf16.msra.mxu0 %v629
    %693 = vmatprep.subr.bf16.mxu0 %v628
    %694 = vmatpush1.bf16.msra.mxu0 %v627
    %695 = vmatprep.subr.bf16.mxu0 %v626
    %696 = vmatpush1.bf16.msra.mxu0 %v625
    %697 = vmatprep.subr.bf16.mxu0 %v624
    %698 = vmatpush1.bf16.msra.mxu0 %v623
    %699 = vmatprep.subr.bf16.mxu0 %v622
    %700 = vmatpush1.bf16.msra.mxu0 %v621
    %701 = vmatprep.subr.bf16.mxu0 %v652
    %702 = vmatpush2.bf16.msra.mxu0 %v651
    %703 = vmatprep.subr.bf16.mxu0 %v650
    %704 = vmatpush2.bf16.msra.mxu0 %v649
    %705 = vmatprep.subr.bf16.mxu0 %v648
    %706 = vmatpush2.bf16.msra.mxu0 %v647
    %707 = vmatprep.subr.bf16.mxu0 %v646
    %708 = vmatpush2.bf16.msra.mxu0 %v645
    %709 = vmatprep.subr.bf16.mxu0 %v644
    %710 = vmatpush2.bf16.msra.mxu0 %v643
    %711 = vmatprep.subr.bf16.mxu0 %v642
    %712 = vmatpush2.bf16.msra.mxu0 %v641
    %713 = vmatprep.subr.bf16.mxu0 %v640
    %714 = vmatpush2.bf16.msra.mxu0 %v639
    %715 = vmatprep.subr.bf16.mxu0 %v638
    %716 = vmatpush2.bf16.msra.mxu0 %v637
    %717 = vmatprep.mubr.bf16.mxu0 %v480
    %718 = vmatmul.mubr.bf16.gmra.mxu0 %v479
    %v719 = vpop.f32.mrf.mxu0
    %v720 = vadd.f32 %v518, %v719
    %v721 = vpop.f32.mrf.mxu0
    %v722 = vadd.f32 %v522, %v721
    %v723 = vpop.f32.mrf.mxu0
    %v724 = vpop.f32.mrf.mxu0
    %725 = vdwg.mxu0
    %v726 = vmax.f32 %v720, 0.0
    %v727 = vmax.f32 %v722, 0.0
    %v728 = vadd.f32 %v477, %v726
    %v729 = vadd.f32 %v478, %v727
    %v730 = vpack.c.bf16 %v728, %v728
    %v731 = vpack.c.bf16 %v729, %v729
    %v732 = vld [vmem:[#allocation10] sm:$0xf]
    %v733 = vld [vmem:[#allocation10 + $0x4] sm:$0xf]
    %v734 = vld [vmem:[#allocation10 + $0x8] sm:$0xf]
    %v735 = vld [vmem:[#allocation10 + $0xc] sm:$0xf]
    %v736 = vld [vmem:[#allocation10 + $0x10] sm:$0xf]
    %v737 = vld [vmem:[#allocation10 + $0x14] sm:$0xf]
    %v738 = vld [vmem:[#allocation10 + $0x18] sm:$0xf]
    %v739 = vld [vmem:[#allocation10 + $0x1c] sm:$0xf]
    %v740 = vld [vmem:[#allocation10 + $0x20] sm:$0xf]
    %v741 = vld [vmem:[#allocation10 + $0x24] sm:$0xf]
    %v742 = vld [vmem:[#allocation10 + $0x28] sm:$0xf]
    %v743 = vld [vmem:[#allocation10 + $0x2c] sm:$0xf]
    %v744 = vld [vmem:[#allocation10 + $0x30] sm:$0xf]
    %v745 = vld [vmem:[#allocation10 + $0x34] sm:$0xf]
    %v746 = vld [vmem:[#allocation10 + $0x38] sm:$0xf]
    %v747 = vld [vmem:[#allocation10 + $0x3c] sm:$0xf]
    %v748 = vld [vmem:[#allocation10 + $0x40] sm:$0xf]
    %v749 = vld [vmem:[#allocation10 + $0x44] sm:$0xf]
    %v750 = vld [vmem:[#allocation10 + $0x48] sm:$0xf]
    %v751 = vld [vmem:[#allocation10 + $0x4c] sm:$0xf]
    %v752 = vld [vmem:[#allocation10 + $0x50] sm:$0xf]
    %v753 = vld [vmem:[#allocation10 + $0x54] sm:$0xf]
    %v754 = vld [vmem:[#allocation10 + $0x58] sm:$0xf]
    %v755 = vld [vmem:[#allocation10 + $0x5c] sm:$0xf]
    %v756 = vld [vmem:[#allocation10 + $0x60] sm:$0xf]
    %v757 = vld [vmem:[#allocation10 + $0x64] sm:$0xf]
    %v758 = vld [vmem:[#allocation10 + $0x68] sm:$0xf]
    %v759 = vld [vmem:[#allocation10 + $0x6c] sm:$0xf]
    %v760 = vld [vmem:[#allocation10 + $0x70] sm:$0xf]
    %v761 = vld [vmem:[#allocation10 + $0x74] sm:$0xf]
    %v762 = vld [vmem:[#allocation10 + $0x78] sm:$0xf]
    %v763 = vld [vmem:[#allocation10 + $0x7c] sm:$0xf]
    %v764 = vld [vmem:[%s10] sm:$0x1]
    %v766 = vlaneseq
    %v767 = vshrl.u32 %v766, 7
    %v768 = vsub.s32 0, %v767
    %v769 = vrot.slane %v764, %v768
    %v803 = vunpack.c.l.b16 %v732
    %v804 = vunpack.c.l.b16 %v733
    %v805 = vunpack.c.l.b16 %v734
    %v806 = vunpack.c.l.b16 %v735
    %v807 = vunpack.c.l.b16 %v736
    %v808 = vunpack.c.l.b16 %v737
    %v809 = vunpack.c.l.b16 %v738
    %v810 = vunpack.c.l.b16 %v739
    %v811 = vunpack.c.l.b16 %v740
    %v812 = vunpack.c.l.b16 %v741
    %v813 = vunpack.c.l.b16 %v742
    %v814 = vunpack.c.l.b16 %v743
    %v815 = vunpack.c.l.b16 %v744
    %v816 = vunpack.c.l.b16 %v745
    %v817 = vunpack.c.l.b16 %v746
    %v818 = vunpack.c.l.b16 %v747
    %v819 = vunpack.c.l.b16 %v748
    %v820 = vunpack.c.l.b16 %v749
    %v821 = vunpack.c.l.b16 %v750
    %v822 = vunpack.c.l.b16 %v751
    %v823 = vunpack.c.l.b16 %v752
    %v824 = vunpack.c.l.b16 %v753
    %v825 = vunpack.c.l.b16 %v754
    %v826 = vunpack.c.l.b16 %v755
    %v827 = vunpack.c.l.b16 %v756
    %v828 = vunpack.c.l.b16 %v757
    %v829 = vunpack.c.l.b16 %v758
    %v830 = vunpack.c.l.b16 %v759
    %v831 = vunpack.c.l.b16 %v760
    %v832 = vunpack.c.l.b16 %v761
    %v833 = vunpack.c.l.b16 %v762
    %v834 = vunpack.c.l.b16 %v763
    %v835 = vpack.c.b16 %v804, %v803
    %v836 = vpack.c.b16 %v806, %v805
    %v837 = vpack.c.b16 %v808, %v807
    %v838 = vpack.c.b16 %v810, %v809
    %v839 = vpack.c.b16 %v812, %v811
    %v840 = vpack.c.b16 %v814, %v813
    %v841 = vpack.c.b16 %v816, %v815
    %v842 = vpack.c.b16 %v818, %v817
    %v843 = vpack.c.b16 %v820, %v819
    %v844 = vpack.c.b16 %v822, %v821
    %v845 = vpack.c.b16 %v824, %v823
    %v846 = vpack.c.b16 %v826, %v825
    %v847 = vpack.c.b16 %v828, %v827
    %v848 = vpack.c.b16 %v830, %v829
    %v849 = vpack.c.b16 %v832, %v831
    %v850 = vpack.c.b16 %v834, %v833
    %867 = vmatprep.subr.bf16.mxu0 0
    %868 = vmatpush1.bf16.msra.mxu0 %v842
    %869 = vmatprep.subr.bf16.mxu0 0
    %870 = vmatpush1.bf16.msra.mxu0 %v841
    %871 = vmatprep.subr.bf16.mxu0 0
    %872 = vmatpush1.bf16.msra.mxu0 %v840
    %873 = vmatprep.subr.bf16.mxu0 0
    %874 = vmatpush1.bf16.msra.mxu0 %v839
    %875 = vmatprep.subr.bf16.mxu0 0
    %876 = vmatpush1.bf16.msra.mxu0 %v838
    %877 = vmatprep.subr.bf16.mxu0 0
    %878 = vmatpush1.bf16.msra.mxu0 %v837
    %879 = vmatprep.subr.bf16.mxu0 0
    %880 = vmatpush1.bf16.msra.mxu0 %v836
    %881 = vmatprep.subr.bf16.mxu0 0
    %882 = vmatpush1.bf16.msra.mxu0 %v835
    %883 = vmatprep.subr.bf16.mxu0 0
    %884 = vmatpush2.bf16.msra.mxu0 %v850
    %885 = vmatprep.subr.bf16.mxu0 0
    %886 = vmatpush2.bf16.msra.mxu0 %v849
    %887 = vmatprep.subr.bf16.mxu0 0
    %888 = vmatpush2.bf16.msra.mxu0 %v848
    %889 = vmatprep.subr.bf16.mxu0 0
    %890 = vmatpush2.bf16.msra.mxu0 %v847
    %891 = vmatprep.subr.bf16.mxu0 0
    %892 = vmatpush2.bf16.msra.mxu0 %v846
    %893 = vmatprep.subr.bf16.mxu0 0
    %894 = vmatpush2.bf16.msra.mxu0 %v845
    %895 = vmatprep.subr.bf16.mxu0 0
    %896 = vmatpush2.bf16.msra.mxu0 %v844
    %897 = vmatprep.subr.bf16.mxu0 0
    %898 = vmatpush2.bf16.msra.mxu0 %v843
    %899 = vmatprep.mubr.bf16.mxu0 %v731
    %900 = vmatmul.mubr.bf16.gmra.mxu0 %v730
    %v901 = vpop.f32.mrf.mxu0
    %v902 = vadd.f32 %v769, %v901
    %v903 = vpop.f32.mrf.mxu0
    %v904 = vpop.f32.mrf.mxu0
    %v905 = vpop.f32.mrf.mxu0
    %906 = vdwg.mxu0
    %v907 = vmax.f32 %v902, 0.0
    %v908 = vpack.c.bf16 %v907, %v907
    %v909 = vld [vmem:[#allocation11] sm:$0xf]
    %v910 = vld [vmem:[#allocation11 + $0x4] sm:$0xf]
    %v911 = vld [vmem:[#allocation11 + $0x8] sm:$0xf]
    %v912 = vld [vmem:[#allocation11 + $0xc] sm:$0xf]
    %v913 = vld [vmem:[#allocation11 + $0x10] sm:$0xf]
    %v914 = vld [vmem:[#allocation11 + $0x14] sm:$0xf]
    %v915 = vld [vmem:[#allocation11 + $0x18] sm:$0xf]
    %v916 = vld [vmem:[#allocation11 + $0x1c] sm:$0xf]
    %v917 = vld [vmem:[#allocation11 + $0x20] sm:$0xf]
    %v918 = vld [vmem:[#allocation11 + $0x24] sm:$0xf]
    %v919 = vld [vmem:[#allocation11 + $0x28] sm:$0xf]
    %v920 = vld [vmem:[#allocation11 + $0x2c] sm:$0xf]
    %v921 = vld [vmem:[#allocation11 + $0x30] sm:$0xf]
    %v922 = vld [vmem:[#allocation11 + $0x34] sm:$0xf]
    %v923 = vld [vmem:[#allocation11 + $0x38] sm:$0xf]
    %v924 = vld [vmem:[#allocation11 + $0x3c] sm:$0xf]
    %v925 = vld [vmem:[%s12] sm:$0x1]
    %v927 = vlaneseq
    %v928 = vshrl.u32 %v927, 7
    %v929 = vsub.s32 0, %v928
    %v930 = vrot.slane %v925, %v929
    %v948 = vunpack.c.l.b16 %v909
    %v949 = vunpack.c.l.b16 %v910
    %v950 = vunpack.c.l.b16 %v911
    %v951 = vunpack.c.l.b16 %v912
    %v952 = vunpack.c.l.b16 %v913
    %v953 = vunpack.c.l.b16 %v914
    %v954 = vunpack.c.l.b16 %v915
    %v955 = vunpack.c.l.b16 %v916
    %v956 = vunpack.c.l.b16 %v917
    %v957 = vunpack.c.l.b16 %v918
    %v958 = vunpack.c.l.b16 %v919
    %v959 = vunpack.c.l.b16 %v920
    %v960 = vunpack.c.l.b16 %v921
    %v961 = vunpack.c.l.b16 %v922
    %v962 = vunpack.c.l.b16 %v923
    %v963 = vunpack.c.l.b16 %v924
    %v964 = vpack.c.b16 %v949, %v948
    %v965 = vpack.c.b16 %v951, %v950
    %v966 = vpack.c.b16 %v953, %v952
    %v967 = vpack.c.b16 %v955, %v954
    %v968 = vpack.c.b16 %v957, %v956
    %v969 = vpack.c.b16 %v959, %v958
    %v970 = vpack.c.b16 %v961, %v960
    %v971 = vpack.c.b16 %v963, %v962
    %980 = vmatprep.subr.bf16.mxu0 0
    %981 = vmatpush1.bf16.msra.mxu0 %v971
    %982 = vmatprep.subr.bf16.mxu0 0
    %983 = vmatpush1.bf16.msra.mxu0 %v970
    %984 = vmatprep.subr.bf16.mxu0 0
    %985 = vmatpush1.bf16.msra.mxu0 %v969
    %986 = vmatprep.subr.bf16.mxu0 0
    %987 = vmatpush1.bf16.msra.mxu0 %v968
    %988 = vmatprep.subr.bf16.mxu0 0
    %989 = vmatpush1.bf16.msra.mxu0 %v967
    %990 = vmatprep.subr.bf16.mxu0 0
    %991 = vmatpush1.bf16.msra.mxu0 %v966
    %992 = vmatprep.subr.bf16.mxu0 0
    %993 = vmatpush1.bf16.msra.mxu0 %v965
    %994 = vmatprep.subr.bf16.mxu0 0
    %995 = vmatpush1.bf16.msra.mxu0 %v964
    %996 = vmatprep.subr.bf16.mxu0 0
    %997 = vmatpush2.bf16.msra.mxu0 0
    %998 = vmatprep.subr.bf16.mxu0 0
    %999 = vmatpush2.bf16.msra.mxu0 0
    %1000 = vmatprep.subr.bf16.mxu0 0
    %1001 = vmatpush2.bf16.msra.mxu0 0
    %1002 = vmatprep.subr.bf16.mxu0 0
    %1003 = vmatpush2.bf16.msra.mxu0 0
    %1004 = vmatprep.subr.bf16.mxu0 0
    %1005 = vmatpush2.bf16.msra.mxu0 0
    %1006 = vmatprep.subr.bf16.mxu0 0
    %1007 = vmatpush2.bf16.msra.mxu0 0
    %1008 = vmatprep.subr.bf16.mxu0 0
    %1009 = vmatpush2.bf16.msra.mxu0 0
    %1010 = vmatprep.subr.bf16.mxu0 0
    %1011 = vmatpush2.bf16.msra.mxu0 0
    %1012 = vmatprep.mubr.bf16.mxu0 0
    %1013 = vmatmul.mubr.bf16.gmra.mxu0 %v908
    %v1014 = vpop.f32.mrf.mxu0
    %v1015 = vadd.f32 %v930, %v1014
    %v1016 = vpop.f32.mrf.mxu0
    %v1017 = vpop.f32.mrf.mxu0
    %v1018 = vpop.f32.mrf.mxu0
    %1019 = vdwg.mxu0
    %1020 = vmax.xlane.f32.xlu0 %v1015
    %v1021 = vpop.xlane.xlu0 %1020
    %v1022 = vsub.f32 %v1015, %v1021
    %v1023 = vmul.f32 %v1022, 1.442695
    %v1024 = vpow.pop %v1023
    %1025 = vadd.xlane.f32.xlu0 %v1024
    %v1026 = vpop.xlane.xlu0 %1025
    %v1027 = vlog2.pop %v1026
    %v1028 = vmul.f32 %v1027, 0.6931472
    %v1029 = vadd.f32 %v1028, %v1021
    %v1030 = vsub.f32 %v1015, %v1029
    %1031 = vst [vmem:[#allocation13] sm:$0xff] %v1030
    // Predicated region
    $region78: #{_forward_impl.1} parent=1 // pred_check
      _
    $region79: #{_forward_impl.1} parent=1 // pred_check_branch
      %1033 = sbr.rel (0) target = $region81
    $region80: #{_forward_impl.1} parent=1 // pred_region
      %s1035 = ssub.s32 128, 128
      %1036 = vsyncadd [#allocation4], %s1035
      %s1038 = sshll.u32 [#allocation13], 4
      %s1039 = int_to_ptr.vmem [resolvable:$true] %s1038
      %1041 = dma.vmem_to_hbm [thread:$0]  %s1039, 128, %s13, [#allocation4]
    $region81: #{_forward_impl.1} parent=1 // pred_fallthru
      _
    // Predicated region
    $region82: #{_forward_impl.1} parent=1 // pred_check
      _
    $region83: #{_forward_impl.1} parent=1 // pred_check_branch
      %1043 = sbr.rel (0) target = $region85
    $region84: #{_forward_impl.1} parent=1 // pred_region
      %1044 = dma.done [#allocation4], 128
    $region85: #{_forward_impl.1} parent=1 // pred_fallthru
      _
    %1045 = vsyncpa [#allocation3], 1
    %1046 = vsyncpa [#allocation6], 1
    %1047 = vsyncpa [#allocation9], 1
    %1048 = vsyncpa [#allocation12], 1
    %1049 = vsyncpa [#allocation4], 1

// kernel: _forward_impl.1
$region0: #{_forward_impl.1}
  #allocation0 [shape = 'u32[]', space=smem, size = 0x4, offset = 0x4, fixed_abs, tag = 'smem constant byte address 0x4 - core index']
  #allocation1 [shape = 'u32[144,128]{1,0:T(1,128)}', space=vmem, size = 0x12000, scoped, tag = 'internal scratch']
  %s0 = inlined_call_operand.vmem [shape: bf16[8,64], index: 0, kind: input, shape index: {}]
  %s1 = inlined_call_operand.hbm [shape: bf16[64,128], index: 1, kind: input, shape index: {}]
  %s2 = inlined_call_operand.vmem [shape: f32[1,128], index: 2, kind: input, shape index: {}]
  %s3 = inlined_call_operand.hbm [shape: bf16[128,128], index: 3, kind: input, shape index: {}]
  %s4 = inlined_call_operand.vmem [shape: f32[1,128], index: 4, kind: input, shape index: {}]
  %s5 = inlined_call_operand.hbm [shape: bf16[128,256], index: 5, kind: input, shape index: {}]
  %s6 = inlined_call_operand.vmem [shape: f32[1,256], index: 6, kind: input, shape index: {}]
  %s7 = inlined_call_operand.hbm [shape: bf16[256,256], index: 7, kind: input, shape index: {}]
  %s8 = inlined_call_operand.vmem [shape: f32[1,256], index: 8, kind: input, shape index: {}]
  %s9 = inlined_call_operand.hbm [shape: bf16[256,128], index: 9, kind: input, shape index: {}]
  %s10 = inlined_call_operand.vmem [shape: f32[1,128], index: 10, kind: input, shape index: {}]
  %s11 = inlined_call_operand.hbm [shape: bf16[128,128], index: 11, kind: input, shape index: {}]
  %s12 = inlined_call_operand.vmem [shape: f32[1,128], index: 12, kind: input, shape index: {}]
  %s13 = inlined_call_operand.hbm [shape: f32[8,128], index: 13, kind: output, shape index: {}]
  %s14 = sld [smem:[#allocation0]]
  $region86: #{_forward_impl.1} parent=0
    _
  %s16 = ssub.s32 1, %s14
  %s17 = scalar_select 0, %s16, %s14
  $region1: #{_forward_impl.1} parent=0
    #allocation2 [shape = 'u8[16384]{0}', space=vmem, size = 0x4000, scoped, tag = 'input window, operand 1, single buffered']
    #allocation3 [shape = 's32[1]{0}', space=sflag, size = 0x4, scoped, tag = 'scoped memory for _forward_impl.1']
    #allocation4 [shape = 's32[1]{0}', space=sflag, size = 0x4, scoped, tag = 'scoped memory for _forward_impl.1']
    #allocation5 [shape = 'u8[32768]{0}', space=vmem, size = 0x8000, scoped, tag = 'input window, operand 3, single buffered']
    #allocation6 [shape = 's32[1]{0}', space=sflag, size = 0x4, scoped, tag = 'scoped memory for _forward_impl.1']
    #allocation7 [shape = 'u8[65536]{0}', space=vmem, size = 0x10000, scoped, tag = 'input window, operand 5, single buffered']
    #allocation8 [shape = 'u8[131072]{0}', space=vmem, size = 0x20000, scoped, tag = 'input window, operand 7, single buffered']
    #allocation9 [shape = 's32[1]{0}', space=sflag, size = 0x4, scoped, tag = 'scoped memory for _forward_impl.1']
    #allocation10 [shape = 'u8[65536]{0}', space=vmem, size = 0x10000, scoped, tag = 'input window, operand 9, single buffered']
    #allocation11 [shape = 'u8[32768]{0}', space=vmem, size = 0x8000, scoped, tag = 'input window, operand 11, single buffered']
    #allocation12 [shape = 's32[1]{0}', space=sflag, size = 0x4, scoped, tag = 'scoped memory for _forward_impl.1']
    #allocation13 [shape = 'u8[4096]{0}', space=vmem, size = 0x1000, scoped, tag = 'output window, operand 0, single buffered']
    %18 = vsyncpa [#allocation3], 0
    %19 = vsyncpa [#allocation6], 0
    %20 = vsyncpa [#allocation9], 0
    %21 = vsyncpa [#allocation12], 0
    %22 = vsyncpa [#allocation4], 0
    // Predicated region
    $region2: #{_forward_impl.1} parent=1 // pred_check
      _
    $region3: #{_forward_impl.1} parent=1 // pred_check_branch
      %24 = sbr.rel (0) target = $region5
    $region4: #{_forward_impl.1} parent=1 // pred_region
      _
    $region5: #{_forward_impl.1} parent=1 // pred_fallthru
      _
    // Predicated region
    $region6: #{_forward_impl.1} parent=1 // pred_check
      _
    $region7: #{_forward_impl.1} parent=1 // pred_check_branch
      %26 = sbr.rel (0) target = $region9
    $region8: #{_forward_impl.1} parent=1 // pred_region
      %s28 = ssub.s32 512, 512
      %29 = vsyncadd [#allocation3], %s28
      %s30 = sshll.u32 [#allocation2], 4
      %s31 = int_to_ptr.vmem [resolvable:$true] %s30
      %36 = dma.hbm_to_vmem [thread:$0]  %s1, 512, %s31, [#allocation3], 64, 64, 4
    $region9: #{_forward_impl.1} parent=1 // pred_fallthru
      _
    // Predicated region
    $region10: #{_forward_impl.1} parent=1 // pred_check
      _
    $region11: #{_forward_impl.1} parent=1 // pred_check_branch
      %38 = sbr.rel (0) target = $region13
    $region12: #{_forward_impl.1} parent=1 // pred_region
      _
    $region13: #{_forward_impl.1} parent=1 // pred_fallthru
      _
    // Predicated region
    $region14: #{_forward_impl.1} parent=1 // pred_check
      _
    $region15: #{_forward_impl.1} parent=1 // pred_check_branch
      %40 = sbr.rel (0) target = $region17
    $region16: #{_forward_impl.1} parent=1 // pred_region
      %s42 = ssub.s32 1024, 1024
      %43 = vsyncadd [#allocation6], %s42
      %s44 = sshll.u32 [#allocation5], 4
      %s45 = int_to_ptr.vmem [resolvable:$true] %s44
      %50 = dma.hbm_to_vmem [thread:$0]  %s3, 1024, %s45, [#allocation6], 64, 64, 4
    $region17: #{_forward_impl.1} parent=1 // pred_fallthru
      _
    // Predicated region
    $region18: #{_forward_impl.1} parent=1 // pred_check
      _
    $region19: #{_forward_impl.1} parent=1 // pred_check_branch
      %52 = sbr.rel (0) target = $region21
    $region20: #{_forward_impl.1} parent=1 // pred_region
      _
    $region21: #{_forward_impl.1} parent=1 // pred_fallthru
      _
    // Predicated region
    $region22: #{_forward_impl.1} parent=1 // pred_check
      _
    $region23: #{_forward_impl.1} parent=1 // pred_check_branch
      %54 = sbr.rel (0) target = $region25
    $region24: #{_forward_impl.1} parent=1 // pred_region
      %s56 = ssub.s32 2048, 2048
      %57 = vsyncadd [#allocation6], %s56
      %s58 = sshll.u32 [#allocation7], 4
      %s59 = int_to_ptr.vmem [resolvable:$true] %s58
      %64 = dma.hbm_to_vmem [thread:$0]  %s5, 2048, %s59, [#allocation6], 128, 128, 8
    $region25: #{_forward_impl.1} parent=1 // pred_fallthru
      _
    // Predicated region
    $region26: #{_forward_impl.1} parent=1 // pred_check
      _
    $region27: #{_forward_impl.1} parent=1 // pred_check_branch
      %66 = sbr.rel (0) target = $region29
    $region28: #{_forward_impl.1} parent=1 // pred_region
      _
    $region29: #{_forward_impl.1} parent=1 // pred_fallthru
      _
    // Predicated region
    $region30: #{_forward_impl.1} parent=1 // pred_check
      _
    $region31: #{_forward_impl.1} parent=1 // pred_check_branch
      %68 = sbr.rel (0) target = $region33
    $region32: #{_forward_impl.1} parent=1 // pred_region
      %s70 = ssub.s32 4096, 4096
      %71 = vsyncadd [#allocation9], %s70
      %s72 = sshll.u32 [#allocation8], 4
      %s73 = int_to_ptr.vmem [resolvable:$true] %s72
      %78 = dma.hbm_to_vmem [thread:$0]  %s7, 4096, %s73, [#allocation9], 128, 128, 8
    $region33: #{_forward_impl.1} parent=1 // pred_fallthru
      _
    // Predicated region
    $region34: #{_forward_impl.1} parent=1 // pred_check
      _
    $region35: #{_forward_impl.1} parent=1 // pred_check_branch
      %80 = sbr.rel (0) target = $region37
    $region36: #{_forward_impl.1} parent=1 // pred_region
      _
    $region37: #{_forward_impl.1} parent=1 // pred_fallthru
      _
    // Predicated region
    $region38: #{_forward_impl.1} parent=1 // pred_check
      _
    $region39: #{_forward_impl.1} parent=1 // pred_check_branch
      %82 = sbr.rel (0) target = $region41
    $region40: #{_forward_impl.1} parent=1 // pred_region
      %s84 = ssub.s32 2048, 2048
      %85 = vsyncadd [#allocation9], %s84
      %s86 = sshll.u32 [#allocation10], 4
      %s87 = int_to_ptr.vmem [resolvable:$true] %s86
      %92 = dma.hbm_to_vmem [thread:$0]  %s9, 2048, %s87, [#allocation9], 64, 64, 4
    $region41: #{_forward_impl.1} parent=1 // pred_fallthru
      _
    // Predicated region
    $region42: #{_forward_impl.1} parent=1 // pred_check
      _
    $region43: #{_forward_impl.1} parent=1 // pred_check_branch
      %94 = sbr.rel (0) target = $region45
    $region44: #{_forward_impl.1} parent=1 // pred_region
      _
    $region45: #{_forward_impl.1} parent=1 // pred_fallthru
      _
    // Predicated region
    $region46: #{_forward_impl.1} parent=1 // pred_check
      _
    $region47: #{_forward_impl.1} parent=1 // pred_check_branch
      %96 = sbr.rel (0) target = $region49
    $region48: #{_forward_impl.1} parent=1 // pred_region
      %s98 = ssub.s32 1024, 1024
      %99 = vsyncadd [#allocation12], %s98
      %s100 = sshll.u32 [#allocation11], 4
      %s101 = int_to_ptr.vmem [resolvable:$true] %s100
      %106 = dma.hbm_to_vmem [thread:$0]  %s11, 1024, %s101, [#allocation12], 64, 64, 4
    $region49: #{_forward_impl.1} parent=1 // pred_fallthru
      _
    // Predicated region
    $region50: #{_forward_impl.1} parent=1 // pred_check
      _
    $region51: #{_forward_impl.1} parent=1 // pred_check_branch
      %108 = sbr.rel (0) target = $region53
    $region52: #{_forward_impl.1} parent=1 // pred_region
      _
    $region53: #{_forward_impl.1} parent=1 // pred_fallthru
      _
    // Predicated region
    $region54: #{_forward_impl.1} parent=1 // pred_check
      _
    $region55: #{_forward_impl.1} parent=1 // pred_check_branch
      %110 = sbr.rel (0) target = $region57
    $region56: #{_forward_impl.1} parent=1 // pred_region
      %111 = dma.done [#allocation3], 512
    $region57: #{_forward_impl.1} parent=1 // pred_fallthru
      _
    // Predicated region
    $region58: #{_forward_impl.1} parent=1 // pred_check
      _
    $region59: #{_forward_impl.1} parent=1 // pred_check_branch
      %113 = sbr.rel (0) target = $region61
    $region60: #{_forward_impl.1} parent=1 // pred_region
      %114 = dma.done [#allocation6], 1024
    $region61: #{_forward_impl.1} parent=1 // pred_fallthru
      _
    // Predicated region
    $region62: #{_forward_impl.1} parent=1 // pred_check
      _
    $region63: #{_forward_impl.1} parent=1 // pred_check_branch
      %116 = sbr.rel (0) target = $region65
    $region64: #{_forward_impl.1} parent=1 // pred_region
      %117 = dma.done [#allocation6], 2048
    $region65: #{_forward_impl.1} parent=1 // pred_fallthru
      _
    // Predicated region
    $region66: #{_forward_impl.1} parent=1 // pred_check
      _
    $region67: #{_forward_impl.1} parent=1 // pred_check_branch
      %119 = sbr.rel (0) target = $region69
    $region68: #{_forward_impl.1} parent=1 // pred_region
      %120 = dma.done [#allocation9], 4096
    $region69: #{_forward_impl.1} parent=1 // pred_fallthru
      _
    // Predicated region
    $region70: #{_forward_impl.1} parent=1 // pred_check
      _
    $region71: #{_forward_impl.1} parent=1 // pred_check_branch
      %122 = sbr.rel (0) target = $region73
    $region72: #{_forward_impl.1} parent=1 // pred_region
      %123 = dma.done [#allocation9], 2048
    $region73: #{_forward_impl.1} parent=1 // pred_fallthru
      _
    // Predicated region
    $region74: #{_forward_impl.1} parent=1 // pred_check
      _
    $region75: #{_forward_impl.1} parent=1 // pred_check_branch
      %125 = sbr.rel (0) target = $region77
    $region76: #{_forward_impl.1} parent=1 // pred_region
      %126 = dma.done [#allocation12], 1024
    $region77: #{_forward_impl.1} parent=1 // pred_fallthru
      _
    %v128 = vld [vmem:[%s0] sm:$0xf]
    %v129 = vld [vmem:[#allocation2] sm:$0xf]
    %v130 = vld [vmem:[#allocation2 + $0x4] sm:$0xf]
    %v131 = vld [vmem:[#allocation2 + $0x8] sm:$0xf]
    %v132 = vld [vmem:[#allocation2 + $0xc] sm:$0xf]
    %v133 = vld [vmem:[#allocation2 + $0x10] sm:$0xf]
    %v134 = vld [vmem:[#allocation2 + $0x14] sm:$0xf]
    %v135 = vld [vmem:[#allocation2 + $0x18] sm:$0xf]
    %v136 = vld [vmem:[#allocation2 + $0x1c] sm:$0xf]
    %v137 = vld [vmem:[%s2] sm:$0x1]
    %v139 = vlaneseq
    %v140 = vshrl.u32 %v139, 7
    %v141 = vsub.s32 0, %v140
    %v142 = vrot.slane %v137, %v141
    %v152 = vunpack.c.l.b16 %v129
    %v153 = vunpack.c.l.b16 %v130
    %v154 = vunpack.c.l.b16 %v131
    %v155 = vunpack.c.l.b16 %v132
    %v156 = vunpack.c.l.b16 %v133
    %v157 = vunpack.c.l.b16 %v134
    %v158 = vunpack.c.l.b16 %v135
    %v159 = vunpack.c.l.b16 %v136
    %v160 = vpack.c.b16 %v153, %v152
    %v161 = vpack.c.b16 %v155, %v154
    %v162 = vpack.c.b16 %v157, %v156
    %v163 = vpack.c.b16 %v159, %v158
    %vm168 = vcmask 523264
    %v170 = vsel %vm168, %v128, 0
    %172 = vmatprep.subr.bf16.mxu0 0
    %173 = vmatpush1.bf16.msra.mxu0 0
    %174 = vmatprep.subr.bf16.mxu0 0
    %175 = vmatpush1.bf16.msra.mxu0 0
    %176 = vmatprep.subr.bf16.mxu0 0
    %177 = vmatpush1.bf16.msra.mxu0 0
    %178 = vmatprep.subr.bf16.mxu0 0
    %179 = vmatpush1.bf16.msra.mxu0 0
    %180 = vmatprep.subr.bf16.mxu0 0
    %181 = vmatpush1.bf16.msra.mxu0 %v163
    %182 = vmatprep.subr.bf16.mxu0 0
    %183 = vmatpush1.bf16.msra.mxu0 %v162
    %184 = vmatprep.subr.bf16.mxu0 0
    %185 = vmatpush1.bf16.msra.mxu0 %v161
    %186 = vmatprep.subr.bf16.mxu0 0
    %187 = vmatpush1.bf16.msra.mxu0 %v160
    %188 = vmatprep.subr.bf16.mxu0 0
    %189 = vmatpush2.bf16.msra.mxu0 0
    %190 = vmatprep.subr.bf16.mxu0 0
    %191 = vmatpush2.bf16.msra.mxu0 0
    %192 = vmatprep.subr.bf16.mxu0 0
    %193 = vmatpush2.bf16.msra.mxu0 0
    %194 = vmatprep.subr.bf16.mxu0 0
    %195 = vmatpush2.bf16.msra.mxu0 0
    %196 = vmatprep.subr.bf16.mxu0 0
    %197 = vmatpush2.bf16.msra.mxu0 0
    %198 = vmatprep.subr.bf16.mxu0 0
    %199 = vmatpush2.bf16.msra.mxu0 0
    %200 = vmatprep.subr.bf16.mxu0 0
    %201 = vmatpush2.bf16.msra.mxu0 0
    %202 = vmatprep.subr.bf16.mxu0 0
    %203 = vmatpush2.bf16.msra.mxu0 0
    %204 = vmatprep.mubr.bf16.mxu0 0
    %205 = vmatmul.mubr.bf16.gmra.mxu0 %v170
    %v206 = vpop.f32.mrf.mxu0
    %v207 = vadd.f32 %v142, %v206
    %v208 = vpop.f32.mrf.mxu0
    %v209 = vpop.f32.mrf.mxu0
    %v210 = vpop.f32.mrf.mxu0
    %211 = vdwg.mxu0
    %v212 = vmax.f32 %v207, 0.0
    %v213 = vpack.c.bf16 %v212, %v212
    %v214 = vld [vmem:[#allocation5] sm:$0xf]
    %v215 = vld [vmem:[#allocation5 + $0x4] sm:$0xf]
    %v216 = vld [vmem:[#allocation5 + $0x8] sm:$0xf]
    %v217 = vld [vmem:[#allocation5 + $0xc] sm:$0xf]
    %v218 = vld [vmem:[#allocation5 + $0x10] sm:$0xf]
    %v219 = vld [vmem:[#allocation5 + $0x14] sm:$0xf]
    %v220 = vld [vmem:[#allocation5 + $0x18] sm:$0xf]
    %v221 = vld [vmem:[#allocation5 + $0x1c] sm:$0xf]
    %v222 = vld [vmem:[#allocation5 + $0x20] sm:$0xf]
    %v223 = vld [vmem:[#allocation5 + $0x24] sm:$0xf]
    %v224 = vld [vmem:[#allocation5 + $0x28] sm:$0xf]
    %v225 = vld [vmem:[#allocation5 + $0x2c] sm:$0xf]
    %v226 = vld [vmem:[#allocation5 + $0x30] sm:$0xf]
    %v227 = vld [vmem:[#allocation5 + $0x34] sm:$0xf]
    %v228 = vld [vmem:[#allocation5 + $0x38] sm:$0xf]
    %v229 = vld [vmem:[#allocation5 + $0x3c] sm:$0xf]
    %v230 = vld [vmem:[%s4] sm:$0x1]
    %v232 = vlaneseq
    %v233 = vshrl.u32 %v232, 7
    %v234 = vsub.s32 0, %v233
    %v235 = vrot.slane %v230, %v234
    %v253 = vunpack.c.l.b16 %v214
    %v254 = vunpack.c.l.b16 %v215
    %v255 = vunpack.c.l.b16 %v216
    %v256 = vunpack.c.l.b16 %v217
    %v257 = vunpack.c.l.b16 %v218
    %v258 = vunpack.c.l.b16 %v219
    %v259 = vunpack.c.l.b16 %v220
    %v260 = vunpack.c.l.b16 %v221
    %v261 = vunpack.c.l.b16 %v222
    %v262 = vunpack.c.l.b16 %v223
    %v263 = vunpack.c.l.b16 %v224
    %v264 = vunpack.c.l.b16 %v225
    %v265 = vunpack.c.l.b16 %v226
    %v266 = vunpack.c.l.b16 %v227
    %v267 = vunpack.c.l.b16 %v228
    %v268 = vunpack.c.l.b16 %v229
    %v269 = vpack.c.b16 %v254, %v253
    %v270 = vpack.c.b16 %v256, %v255
    %v271 = vpack.c.b16 %v258, %v257
    %v272 = vpack.c.b16 %v260, %v259
    %v273 = vpack.c.b16 %v262, %v261
    %v274 = vpack.c.b16 %v264, %v263
    %v275 = vpack.c.b16 %v266, %v265
    %v276 = vpack.c.b16 %v268, %v267
    %285 = vmatprep.subr.bf16.mxu0 0
    %286 = vmatpush1.bf16.msra.mxu0 %v276
    %287 = vmatprep.subr.bf16.mxu0 0
    %288 = vmatpush1.bf16.msra.mxu0 %v275
    %289 = vmatprep.subr.bf16.mxu0 0
    %290 = vmatpush1.bf16.msra.mxu0 %v274
    %291 = vmatprep.subr.bf16.mxu0 0
    %292 = vmatpush1.bf16.msra.mxu0 %v273
    %293 = vmatprep.subr.bf16.mxu0 0
    %294 = vmatpush1.bf16.msra.mxu0 %v272
    %295 = vmatprep.subr.bf16.mxu0 0
    %296 = vmatpush1.bf16.msra.mxu0 %v271
    %297 = vmatprep.subr.bf16.mxu0 0
    %298 = vmatpush1.bf16.msra.mxu0 %v270
    %299 = vmatprep.subr.bf16.mxu0 0
    %300 = vmatpush1.bf16.msra.mxu0 %v269
    %301 = vmatprep.subr.bf16.mxu0 0
    %302 = vmatpush2.bf16.msra.mxu0 0
    %303 = vmatprep.subr.bf16.mxu0 0
    %304 = vmatpush2.bf16.msra.mxu0 0
    %305 = vmatprep.subr.bf16.mxu0 0
    %306 = vmatpush2.bf16.msra.mxu0 0
    %307 = vmatprep.subr.bf16.mxu0 0
    %308 = vmatpush2.bf16.msra.mxu0 0
    %309 = vmatprep.subr.bf16.mxu0 0
    %310 = vmatpush2.bf16.msra.mxu0 0
    %311 = vmatprep.subr.bf16.mxu0 0
    %312 = vmatpush2.bf16.msra.mxu0 0
    %313 = vmatprep.subr.bf16.mxu0 0
    %314 = vmatpush2.bf16.msra.mxu0 0
    %315 = vmatprep.subr.bf16.mxu0 0
    %316 = vmatpush2.bf16.msra.mxu0 0
    %317 = vmatprep.mubr.bf16.mxu0 0
    %318 = vmatmul.mubr.bf16.gmra.mxu0 %v213
    %v319 = vpop.f32.mrf.mxu0
    %v320 = vadd.f32 %v235, %v319
    %v321 = vpop.f32.mrf.mxu0
    %v322 = vpop.f32.mrf.mxu0
    %v323 = vpop.f32.mrf.mxu0
    %324 = vdwg.mxu0
    %v325 = vmax.f32 %v320, 0.0
    %v326 = vadd.f32 %v212, %v325
    %v327 = vpack.c.bf16 %v326, %v326
    %v328 = vld [vmem:[#allocation7] sm:$0xff]
    %v329 = vld [vmem:[#allocation7 + $0x8] sm:$0xff]
    %v330 = vld [vmem:[#allocation7 + $0x10] sm:$0xff]
    %v331 = vld [vmem:[#allocation7 + $0x18] sm:$0xff]
    %v332 = vld [vmem:[#allocation7 + $0x20] sm:$0xff]
    %v333 = vld [vmem:[#allocation7 + $0x28] sm:$0xff]
    %v334 = vld [vmem:[#allocation7 + $0x30] sm:$0xff]
    %v335 = vld [vmem:[#allocation7 + $0x38] sm:$0xff]
    %v336 = vld [vmem:[#allocation7 + $0x40] sm:$0xff]
    %v337 = vld [vmem:[#allocation7 + $0x48] sm:$0xff]
    %v338 = vld [vmem:[#allocation7 + $0x50] sm:$0xff]
    %v339 = vld [vmem:[#allocation7 + $0x58] sm:$0xff]
    %v340 = vld [vmem:[#allocation7 + $0x60] sm:$0xff]
    %v341 = vld [vmem:[#allocation7 + $0x68] sm:$0xff]
    %v342 = vld [vmem:[#allocation7 + $0x70] sm:$0xff]
    %v343 = vld [vmem:[#allocation7 + $0x78] sm:$0xff]
    %v344 = vld [vmem:[%s6] sm:$0x3]
    %v346 = vlaneseq
    %v347 = vshrl.u32 %v346, 7
    %v348 = vsub.s32 0, %v347
    %v349 = vrot.slane %v344, %v348
    %v350 = vlaneseq
    %v351 = vshrl.u32 %v350, 7
    %v352 = vsub.s32 1, %v351
    %v353 = vrot.slane %v344, %v352
    %v372 = vunpack.c.l.b16 %v328
    %v373 = vunpack.c.h.b16 %v328
    %v374 = vunpack.c.l.b16 %v329
    %v375 = vunpack.c.h.b16 %v329
    %v376 = vunpack.c.l.b16 %v330
    %v377 = vunpack.c.h.b16 %v330
    %v378 = vunpack.c.l.b16 %v331
    %v379 = vunpack.c.h.b16 %v331
    %v380 = vunpack.c.l.b16 %v332
    %v381 = vunpack.c.h.b16 %v332
    %v382 = vunpack.c.l.b16 %v333
    %v383 = vunpack.c.h.b16 %v333
    %v384 = vunpack.c.l.b16 %v334
    %v385 = vunpack.c.h.b16 %v334
    %v386 = vunpack.c.l.b16 %v335
    %v387 = vunpack.c.h.b16 %v335
    %v388 = vunpack.c.l.b16 %v336
    %v389 = vunpack.c.h.b16 %v336
    %v390 = vunpack.c.l.b16 %v337
    %v391 = vunpack.c.h.b16 %v337
    %v392 = vunpack.c.l.b16 %v338
    %v393 = vunpack.c.h.b16 %v338
    %v394 = vunpack.c.l.b16 %v339
    %v395 = vunpack.c.h.b16 %v339
    %v396 = vunpack.c.l.b16 %v340
    %v397 = vunpack.c.h.b16 %v340
    %v398 = vunpack.c.l.b16 %v341
    %v399 = vunpack.c.h.b16 %v341
    %v400 = vunpack.c.l.b16 %v342
    %v401 = vunpack.c.h.b16 %v342
    %v402 = vunpack.c.l.b16 %v343
    %v403 = vunpack.c.h.b16 %v343
    %v404 = vpack.c.b16 %v374, %v372
    %v405 = vpack.c.b16 %v375, %v373
    %v406 = vpack.c.b16 %v378, %v376
    %v407 = vpack.c.b16 %v379, %v377
    %v408 = vpack.c.b16 %v382, %v380
    %v409 = vpack.c.b16 %v383, %v381
    %v410 = vpack.c.b16 %v386, %v384
    %v411 = vpack.c.b16 %v387, %v385
    %v412 = vpack.c.b16 %v390, %v388
    %v413 = vpack.c.b16 %v391, %v389
    %v414 = vpack.c.b16 %v394, %v392
    %v415 = vpack.c.b16 %v395, %v393
    %v416 = vpack.c.b16 %v398, %v396
    %v417 = vpack.c.b16 %v399, %v397
    %v418 = vpack.c.b16 %v402, %v400
    %v419 = vpack.c.b16 %v403, %v401
    %436 = vmatprep.subr.bf16.mxu0 %v419
    %437 = vmatpush1.bf16.msra.mxu0 %v418
    %438 = vmatprep.subr.bf16.mxu0 %v417
    %439 = vmatpush1.bf16.msra.mxu0 %v416
    %440 = vmatprep.subr.bf16.mxu0 %v415
    %441 = vmatpush1.bf16.msra.mxu0 %v414
    %442 = vmatprep.subr.bf16.mxu0 %v413
    %443 = vmatpush1.bf16.msra.mxu0 %v412
    %444 = vmatprep.subr.bf16.mxu0 %v411
    %445 = vmatpush1.bf16.msra.mxu0 %v410
    %446 = vmatprep.subr.bf16.mxu0 %v409
    %447 = vmatpush1.bf16.msra.mxu0 %v408
    %448 = vmatprep.subr.bf16.mxu0 %v407
    %449 = vmatpush1.bf16.msra.mxu0 %v406
    %450 = vmatprep.subr.bf16.mxu0 %v405
    %451 = vmatpush1.bf16.msra.mxu0 %v404
    %452 = vmatprep.subr.bf16.mxu0 0
    %453 = vmatpush2.bf16.msra.mxu0 0
    %454 = vmatprep.subr.bf16.mxu0 0
    %455 = vmatpush2.bf16.msra.mxu0 0
    %456 = vmatprep.subr.bf16.mxu0 0
    %457 = vmatpush2.bf16.msra.mxu0 0
    %458 = vmatprep.subr.bf16.mxu0 0
    %459 = vmatpush2.bf16.msra.mxu0 0
    %460 = vmatprep.subr.bf16.mxu0 0
    %461 = vmatpush2.bf16.msra.mxu0 0
    %462 = vmatprep.subr.bf16.mxu0 0
    %463 = vmatpush2.bf16.msra.mxu0 0
    %464 = vmatprep.subr.bf16.mxu0 0
    %465 = vmatpush2.bf16.msra.mxu0 0
    %466 = vmatprep.subr.bf16.mxu0 0
    %467 = vmatpush2.bf16.msra.mxu0 0
    %468 = vmatprep.mubr.bf16.mxu0 0
    %469 = vmatmul.mubr.bf16.gmra.mxu0 %v327
    %v470 = vpop.f32.mrf.mxu0
    %v471 = vadd.f32 %v349, %v470
    %v472 = vpop.f32.mrf.mxu0
    %v473 = vadd.f32 %v353, %v472
    %v474 = vpop.f32.mrf.mxu0
    %v475 = vpop.f32.mrf.mxu0
    %476 = vdwg.mxu0
    %v477 = vmax.f32 %v471, 0.0
    %v478 = vmax.f32 %v473, 0.0
    %v479 = vpack.c.bf16 %v477, %v477
    %v480 = vpack.c.bf16 %v478, %v478
    %v481 = vld [vmem:[#allocation8] sm:$0xff]
    %v482 = vld [vmem:[#allocation8 + $0x8] sm:$0xff]
    %v483 = vld [vmem:[#allocation8 + $0x10] sm:$0xff]
    %v484 = vld [vmem:[#allocation8 + $0x18] sm:$0xff]
    %v485 = vld [vmem:[#allocation8 + $0x20] sm:$0xff]
    %v486 = vld [vmem:[#allocation8 + $0x28] sm:$0xff]
    %v487 = vld [vmem:[#allocation8 + $0x30] sm:$0xff]
    %v488 = vld [vmem:[#allocation8 + $0x38] sm:$0xff]
    %v489 = vld [vmem:[#allocation8 + $0x40] sm:$0xff]
    %v490 = vld [vmem:[#allocation8 + $0x48] sm:$0xff]
    %v491 = vld [vmem:[#allocation8 + $0x50] sm:$0xff]
    %v492 = vld [vmem:[#allocation8 + $0x58] sm:$0xff]
    %v493 = vld [vmem:[#allocation8 + $0x60] sm:$0xff]
    %v494 = vld [vmem:[#allocation8 + $0x68] sm:$0xff]
    %v495 = vld [vmem:[#allocation8 + $0x70] sm:$0xff]
    %v496 = vld [vmem:[#allocation8 + $0x78] sm:$0xff]
    %v497 = vld [vmem:[#allocation8 + $0x80] sm:$0xff]
    %v498 = vld [vmem:[#allocation8 + $0x88] sm:$0xff]
    %v499 = vld [vmem:[#allocation8 + $0x90] sm:$0xff]
    %v500 = vld [vmem:[#allocation8 + $0x98] sm:$0xff]
    %v501 = vld [vmem:[#allocation8 + $0xa0] sm:$0xff]
    %v502 = vld [vmem:[#allocation8 + $0xa8] sm:$0xff]
    %v503 = vld [vmem:[#allocation8 + $0xb0] sm:$0xff]
    %v504 = vld [vmem:[#allocation8 + $0xb8] sm:$0xff]
    %v505 = vld [vmem:[#allocation8 + $0xc0] sm:$0xff]
    %v506 = vld [vmem:[#allocation8 + $0xc8] sm:$0xff]
    %v507 = vld [vmem:[#allocation8 + $0xd0] sm:$0xff]
    %v508 = vld [vmem:[#allocation8 + $0xd8] sm:$0xff]
    %v509 = vld [vmem:[#allocation8 + $0xe0] sm:$0xff]
    %v510 = vld [vmem:[#allocation8 + $0xe8] sm:$0xff]
    %v511 = vld [vmem:[#allocation8 + $0xf0] sm:$0xff]
    %v512 = vld [vmem:[#allocation8 + $0xf8] sm:$0xff]
    %v513 = vld [vmem:[%s8] sm:$0x3]
    %v515 = vlaneseq
    %v516 = vshrl.u32 %v515, 7
    %v517 = vsub.s32 0, %v516
    %v518 = vrot.slane %v513, %v517
    %v519 = vlaneseq
    %v520 = vshrl.u32 %v519, 7
    %v521 = vsub.s32 1, %v520
    %v522 = vrot.slane %v513, %v521
    %v557 = vunpack.c.l.b16 %v481
    %v558 = vunpack.c.h.b16 %v481
    %v559 = vunpack.c.l.b16 %v482
    %v560 = vunpack.c.h.b16 %v482
    %v561 = vunpack.c.l.b16 %v483
    %v562 = vunpack.c.h.b16 %v483
    %v563 = vunpack.c.l.b16 %v484
    %v564 = vunpack.c.h.b16 %v484
    %v565 = vunpack.c.l.b16 %v485
    %v566 = vunpack.c.h.b16 %v485
    %v567 = vunpack.c.l.b16 %v486
    %v568 = vunpack.c.h.b16 %v486
    %v569 = vunpack.c.l.b16 %v487
    %v570 = vunpack.c.h.b16 %v487
    %v571 = vunpack.c.l.b16 %v488
    %v572 = vunpack.c.h.b16 %v488
    %v573 = vunpack.c.l.b16 %v489
    %v574 = vunpack.c.h.b16 %v489
    %v575 = vunpack.c.l.b16 %v490
    %v576 = vunpack.c.h.b16 %v490
    %v577 = vunpack.c.l.b16 %v491
    %v578 = vunpack.c.h.b16 %v491
    %v579 = vunpack.c.l.b16 %v492
    %v580 = vunpack.c.h.b16 %v492
    %v581 = vunpack.c.l.b16 %v493
    %v582 = vunpack.c.h.b16 %v493
    %v583 = vunpack.c.l.b16 %v494
    %v584 = vunpack.c.h.b16 %v494
    %v585 = vunpack.c.l.b16 %v495
    %v586 = vunpack.c.h.b16 %v495
    %v587 = vunpack.c.l.b16 %v496
    %v588 = vunpack.c.h.b16 %v496
    %v589 = vunpack.c.l.b16 %v497
    %v590 = vunpack.c.h.b16 %v497
    %v591 = vunpack.c.l.b16 %v498
    %v592 = vunpack.c.h.b16 %v498
    %v593 = vunpack.c.l.b16 %v499
    %v594 = vunpack.c.h.b16 %v499
    %v595 = vunpack.c.l.b16 %v500
    %v596 = vunpack.c.h.b16 %v500
    %v597 = vunpack.c.l.b16 %v501
    %v598 = vunpack.c.h.b16 %v501
    %v599 = vunpack.c.l.b16 %v502
    %v600 = vunpack.c.h.b16 %v502
    %v601 = vunpack.c.l.b16 %v503
    %v602 = vunpack.c.h.b16 %v503
    %v603 = vunpack.c.l.b16 %v504
    %v604 = vunpack.c.h.b16 %v504
    %v605 = vunpack.c.l.b16 %v505
    %v606 = vunpack.c.h.b16 %v505
    %v607 = vunpack.c.l.b16 %v506
    %v608 = vunpack.c.h.b16 %v506
    %v609 = vunpack.c.l.b16 %v507
    %v610 = vunpack.c.h.b16 %v507
    %v611 = vunpack.c.l.b16 %v508
    %v612 = vunpack.c.h.b16 %v508
    %v613 = vunpack.c.l.b16 %v509
    %v614 = vunpack.c.h.b16 %v509
    %v615 = vunpack.c.l.b16 %v510
    %v616 = vunpack.c.h.b16 %v510
    %v617 = vunpack.c.l.b16 %v511
    %v618 = vunpack.c.h.b16 %v511
    %v619 = vunpack.c.l.b16 %v512
    %v620 = vunpack.c.h.b16 %v512
    %v621 = vpack.c.b16 %v559, %v557
    %v622 = vpack.c.b16 %v560, %v558
    %v623 = vpack.c.b16 %v563, %v561
    %v624 = vpack.c.b16 %v564, %v562
    %v625 = vpack.c.b16 %v567, %v565
    %v626 = vpack.c.b16 %v568, %v566
    %v627 = vpack.c.b16 %v571, %v569
    %v628 = vpack.c.b16 %v572, %v570
    %v629 = vpack.c.b16 %v575, %v573
    %v630 = vpack.c.b16 %v576, %v574
    %v631 = vpack.c.b16 %v579, %v577
    %v632 = vpack.c.b16 %v580, %v578
    %v633 = vpack.c.b16 %v583, %v581
    %v634 = vpack.c.b16 %v584, %v582
    %v635 = vpack.c.b16 %v587, %v585
    %v636 = vpack.c.b16 %v588, %v586
    %v637 = vpack.c.b16 %v591, %v589
    %v638 = vpack.c.b16 %v592, %v590
    %v639 = vpack.c.b16 %v595, %v593
    %v640 = vpack.c.b16 %v596, %v594
    %v641 = vpack.c.b16 %v599, %v597
    %v642 = vpack.c.b16 %v600, %v598
    %v643 = vpack.c.b16 %v603, %v601
    %v644 = vpack.c.b16 %v604, %v602
    %v645 = vpack.c.b16 %v607, %v605
    %v646 = vpack.c.b16 %v608, %v606
    %v647 = vpack.c.b16 %v611, %v609
    %v648 = vpack.c.b16 %v612, %v610
    %v649 = vpack.c.b16 %v615, %v613
    %v650 = vpack.c.b16 %v616, %v614
    %v651 = vpack.c.b16 %v619, %v617
    %v652 = vpack.c.b16 %v620, %v618
    %685 = vmatprep.subr.bf16.mxu0 %v636
    %686 = vmatpush1.bf16.msra.mxu0 %v635
    %687 = vmatprep.subr.bf16.mxu0 %v634
    %688 = vmatpush1.bf16.msra.mxu0 %v633
    %689 = vmatprep.subr.bf16.mxu0 %v632
    %690 = vmatpush1.bf16.msra.mxu0 %v631
    %691 = vmatprep.subr.bf16.mxu0 %v630
    %692 = vmatpush1.bf16.msra.mxu0 %v629
    %693 = vmatprep.subr.bf16.mxu0 %v628
    %694 = vmatpush1.bf16.msra.mxu0 %v627
    %695 = vmatprep.subr.bf16.mxu0 %v626
    %696 = vmatpush1.bf16.msra.mxu0 %v625
    %697 = vmatprep.subr.bf16.mxu0 %v624
    %698 = vmatpush1.bf16.msra.mxu0 %v623
    %699 = vmatprep.subr.bf16.mxu0 %v622
    %700 = vmatpush1.bf16.msra.mxu0 %v621
    %701 = vmatprep.subr.bf16.mxu0 %v652
    %702 = vmatpush2.bf16.msra.mxu0 %v651
    %703 = vmatprep.subr.bf16.mxu0 %v650
    %704 = vmatpush2.bf16.msra.mxu0 %v649
    %705 = vmatprep.subr.bf16.mxu0 %v648
    %706 = vmatpush2.bf16.msra.mxu0 %v647
    %707 = vmatprep.subr.bf16.mxu0 %v646
    %708 = vmatpush2.bf16.msra.mxu0 %v645
    %709 = vmatprep.subr.bf16.mxu0 %v644
    %710 = vmatpush2.bf16.msra.mxu0 %v643
    %711 = vmatprep.subr.bf16.mxu0 %v642
    %712 = vmatpush2.bf16.msra.mxu0 %v641
    %713 = vmatprep.subr.bf16.mxu0 %v640
    %714 = vmatpush2.bf16.msra.mxu0 %v639
    %715 = vmatprep.subr.bf16.mxu0 %v638
    %716 = vmatpush2.bf16.msra.mxu0 %v637
    %717 = vmatprep.mubr.bf16.mxu0 %v480
    %718 = vmatmul.mubr.bf16.gmra.mxu0 %v479
    %v719 = vpop.f32.mrf.mxu0
    %v720 = vadd.f32 %v518, %v719
    %v721 = vpop.f32.mrf.mxu0
    %v722 = vadd.f32 %v522, %v721
    %v723 = vpop.f32.mrf.mxu0
    %v724 = vpop.f32.mrf.mxu0
    %725 = vdwg.mxu0
    %v726 = vmax.f32 %v720, 0.0
    %v727 = vmax.f32 %v722, 0.0
    %v728 = vadd.f32 %v477, %v726
    %v729 = vadd.f32 %v478, %v727
    %v730 = vpack.c.bf16 %v728, %v728
    %v731 = vpack.c.bf16 %v729, %v729
    %v732 = vld [vmem:[#allocation10] sm:$0xf]
    %v733 = vld [vmem:[#allocation10 + $0x4] sm:$0xf]
    %v734 = vld [vmem:[#allocation10 + $0x8] sm:$0xf]
    %v735 = vld [vmem:[#allocation10 + $0xc] sm:$0xf]
    %v736 = vld [vmem:[#allocation10 + $0x10] sm:$0xf]
    %v737 = vld [vmem:[#allocation10 + $0x14] sm:$0xf]
    %v738 = vld [vmem:[#allocation10 + $0x18] sm:$0xf]
    %v739 = vld [vmem:[#allocation10 + $0x1c] sm:$0xf]
    %v740 = vld [vmem:[#allocation10 + $0x20] sm:$0xf]
    %v741 = vld [vmem:[#allocation10 + $0x24] sm:$0xf]
    %v742 = vld [vmem:[#allocation10 + $0x28] sm:$0xf]
    %v743 = vld [vmem:[#allocation10 + $0x2c] sm:$0xf]
    %v744 = vld [vmem:[#allocation10 + $0x30] sm:$0xf]
    %v745 = vld [vmem:[#allocation10 + $0x34] sm:$0xf]
    %v746 = vld [vmem:[#allocation10 + $0x38] sm:$0xf]
    %v747 = vld [vmem:[#allocation10 + $0x3c] sm:$0xf]
    %v748 = vld [vmem:[#allocation10 + $0x40] sm:$0xf]
    %v749 = vld [vmem:[#allocation10 + $0x44] sm:$0xf]
    %v750 = vld [vmem:[#allocation10 + $0x48] sm:$0xf]
    %v751 = vld [vmem:[#allocation10 + $0x4c] sm:$0xf]
    %v752 = vld [vmem:[#allocation10 + $0x50] sm:$0xf]
    %v753 = vld [vmem:[#allocation10 + $0x54] sm:$0xf]
    %v754 = vld [vmem:[#allocation10 + $0x58] sm:$0xf]
    %v755 = vld [vmem:[#allocation10 + $0x5c] sm:$0xf]
    %v756 = vld [vmem:[#allocation10 + $0x60] sm:$0xf]
    %v757 = vld [vmem:[#allocation10 + $0x64] sm:$0xf]
    %v758 = vld [vmem:[#allocation10 + $0x68] sm:$0xf]
    %v759 = vld [vmem:[#allocation10 + $0x6c] sm:$0xf]
    %v760 = vld [vmem:[#allocation10 + $0x70] sm:$0xf]
    %v761 = vld [vmem:[#allocation10 + $0x74] sm:$0xf]
    %v762 = vld [vmem:[#allocation10 + $0x78] sm:$0xf]
    %v763 = vld [vmem:[#allocation10 + $0x7c] sm:$0xf]
    %v764 = vld [vmem:[%s10] sm:$0x1]
    %v766 = vlaneseq
    %v767 = vshrl.u32 %v766, 7
    %v768 = vsub.s32 0, %v767
    %v769 = vrot.slane %v764, %v768
    %v803 = vunpack.c.l.b16 %v732
    %v804 = vunpack.c.l.b16 %v733
    %v805 = vunpack.c.l.b16 %v734
    %v806 = vunpack.c.l.b16 %v735
    %v807 = vunpack.c.l.b16 %v736
    %v808 = vunpack.c.l.b16 %v737
    %v809 = vunpack.c.l.b16 %v738
    %v810 = vunpack.c.l.b16 %v739
    %v811 = vunpack.c.l.b16 %v740
    %v812 = vunpack.c.l.b16 %v741
    %v813 = vunpack.c.l.b16 %v742
    %v814 = vunpack.c.l.b16 %v743
    %v815 = vunpack.c.l.b16 %v744
    %v816 = vunpack.c.l.b16 %v745
    %v817 = vunpack.c.l.b16 %v746
    %v818 = vunpack.c.l.b16 %v747
    %v819 = vunpack.c.l.b16 %v748
    %v820 = vunpack.c.l.b16 %v749
    %v821 = vunpack.c.l.b16 %v750
    %v822 = vunpack.c.l.b16 %v751
    %v823 = vunpack.c.l.b16 %v752
    %v824 = vunpack.c.l.b16 %v753
    %v825 = vunpack.c.l.b16 %v754
    %v826 = vunpack.c.l.b16 %v755
    %v827 = vunpack.c.l.b16 %v756
    %v828 = vunpack.c.l.b16 %v757
    %v829 = vunpack.c.l.b16 %v758
    %v830 = vunpack.c.l.b16 %v759
    %v831 = vunpack.c.l.b16 %v760
    %v832 = vunpack.c.l.b16 %v761
    %v833 = vunpack.c.l.b16 %v762
    %v834 = vunpack.c.l.b16 %v763
    %v835 = vpack.c.b16 %v804, %v803
    %v836 = vpack.c.b16 %v806, %v805
    %v837 = vpack.c.b16 %v808, %v807
    %v838 = vpack.c.b16 %v810, %v809
    %v839 = vpack.c.b16 %v812, %v811
    %v840 = vpack.c.b16 %v814, %v813
    %v841 = vpack.c.b16 %v816, %v815
    %v842 = vpack.c.b16 %v818, %v817
    %v843 = vpack.c.b16 %v820, %v819
    %v844 = vpack.c.b16 %v822, %v821
    %v845 = vpack.c.b16 %v824, %v823
    %v846 = vpack.c.b16 %v826, %v825
    %v847 = vpack.c.b16 %v828, %v827
    %v848 = vpack.c.b16 %v830, %v829
    %v849 = vpack.c.b16 %v832, %v831
    %v850 = vpack.c.b16 %v834, %v833
    %867 = vmatprep.subr.bf16.mxu0 0
    %868 = vmatpush1.bf16.msra.mxu0 %v842
    %869 = vmatprep.subr.bf16.mxu0 0
    %870 = vmatpush1.bf16.msra.mxu0 %v841
    %871 = vmatprep.subr.bf16.mxu0 0
    %872 = vmatpush1.bf16.msra.mxu0 %v840
    %873 = vmatprep.subr.bf16.mxu0 0
    %874 = vmatpush1.bf16.msra.mxu0 %v839
    %875 = vmatprep.subr.bf16.mxu0 0
    %876 = vmatpush1.bf16.msra.mxu0 %v838
    %877 = vmatprep.subr.bf16.mxu0 0
    %878 = vmatpush1.bf16.msra.mxu0 %v837
    %879 = vmatprep.subr.bf16.mxu0 0
    %880 = vmatpush1.bf16.msra.mxu0 %v836
    %881 = vmatprep.subr.bf16.mxu0 0
    %882 = vmatpush1.bf16.msra.mxu0 %v835
    %883 = vmatprep.subr.bf16.mxu0 0
    %884 = vmatpush2.bf16.msra.mxu0 %v850
    %885 = vmatprep.subr.bf16.mxu0 0
    %886 = vmatpush2.bf16.msra.mxu0 %v849
    %887 = vmatprep.subr.bf16.mxu0 0
    %888 = vmatpush2.bf16.msra.mxu0 %v848
    %889 = vmatprep.subr.bf16.mxu0 0
    %890 = vmatpush2.bf16.msra.mxu0 %v847
    %891 = vmatprep.subr.bf16.mxu0 0
    %892 = vmatpush2.bf16.msra.mxu0 %v846
    %893 = vmatprep.subr.bf16.mxu0 0
    %894 = vmatpush2.bf16.msra.mxu0 %v845
    %895 = vmatprep.subr.bf16.mxu0 0
    %896 = vmatpush2.bf16.msra.mxu0 %v844
    %897 = vmatprep.subr.bf16.mxu0 0
    %898 = vmatpush2.bf16.msra.mxu0 %v843
    %899 = vmatprep.mubr.bf16.mxu0 %v731
    %900 = vmatmul.mubr.bf16.gmra.mxu0 %v730
    %v901 = vpop.f32.mrf.mxu0
    %v902 = vadd.f32 %v769, %v901
    %v903 = vpop.f32.mrf.mxu0
    %v904 = vpop.f32.mrf.mxu0
    %v905 = vpop.f32.mrf.mxu0
    %906 = vdwg.mxu0
    %v907 = vmax.f32 %v902, 0.0
    %v908 = vpack.c.bf16 %v907, %v907
    %v909 = vld [vmem:[#allocation11] sm:$0xf]
    %v910 = vld [vmem:[#allocation11 + $0x4] sm:$0xf]
    %v911 = vld [vmem:[#allocation11 + $0x8] sm:$0xf]
    %v912 = vld [vmem:[#allocation11 + $0xc] sm:$0xf]
    %v913 = vld [vmem:[#allocation11 + $0x10] sm:$0xf]
    %v914 = vld [vmem:[#allocation11 + $0x14] sm:$0xf]
    %v915 = vld [vmem:[#allocation11 + $0x18] sm:$0xf]
    %v916 = vld [vmem:[#allocation11 + $0x1c] sm:$0xf]
    %v917 = vld [vmem:[#allocation11 + $0x20] sm:$0xf]
    %v918 = vld [vmem:[#allocation11 + $0x24] sm:$0xf]
    %v919 = vld [vmem:[#allocation11 + $0x28] sm:$0xf]
    %v920 = vld [vmem:[#allocation11 + $0x2c] sm:$0xf]
    %v921 = vld [vmem:[#allocation11 + $0x30] sm:$0xf]
    %v922 = vld [vmem:[#allocation11 + $0x34] sm:$0xf]
    %v923 = vld [vmem:[#allocation11 + $0x38] sm:$0xf]
    %v924 = vld [vmem:[#allocation11 + $0x3c] sm:$0xf]
    %v925 = vld [vmem:[%s12] sm:$0x1]
    %v927 = vlaneseq
    %v928 = vshrl.u32 %v927, 7
    %v929 = vsub.s32 0, %v928
    %v930 = vrot.slane %v925, %v929
    %v948 = vunpack.c.l.b16 %v909
    %v949 = vunpack.c.l.b16 %v910
    %v950 = vunpack.c.l.b16 %v911
    %v951 = vunpack.c.l.b16 %v912
    %v952 = vunpack.c.l.b16 %v913
    %v953 = vunpack.c.l.b16 %v914
    %v954 = vunpack.c.l.b16 %v915
    %v955 = vunpack.c.l.b16 %v916
    %v956 = vunpack.c.l.b16 %v917
    %v957 = vunpack.c.l.b16 %v918
    %v958 = vunpack.c.l.b16 %v919
    %v959 = vunpack.c.l.b16 %v920
    %v960 = vunpack.c.l.b16 %v921
    %v961 = vunpack.c.l.b16 %v922
    %v962 = vunpack.c.l.b16 %v923
    %v963 = vunpack.c.l.b16 %v924
    %v964 = vpack.c.b16 %v949, %v948
    %v965 = vpack.c.b16 %v951, %v950
    %v966 = vpack.c.b16 %v953, %v952
    %v967 = vpack.c.b16 %v955, %v954
    %v968 = vpack.c.b16 %v957, %v956
    %v969 = vpack.c.b16 %v959, %v958
    %v970 = vpack.c.b16 %v961, %v960
    %v971 = vpack.c.b16 %v963, %v962
    %980 = vmatprep.subr.bf16.mxu0 0
    %981 = vmatpush1.bf16.msra.mxu0 %v971
    %982 = vmatprep.subr.bf16.mxu0 0
    %983 = vmatpush1.bf16.msra.mxu0 %v970
    %984 = vmatprep.subr.bf16.mxu0 0
    %985 = vmatpush1.bf16.msra.mxu0 %v969
    %986 = vmatprep.subr.bf16.mxu0 0
    %987 = vmatpush1.bf16.msra.mxu0 %v968
    %988 = vmatprep.subr.bf16.mxu0 0
    %989 = vmatpush1.bf16.msra.mxu0 %v967
    %990 = vmatprep.subr.bf16.mxu0 0
    %991 = vmatpush1.bf16.msra.mxu0 %v966
    %992 = vmatprep.subr.bf16.mxu0 0
    %993 = vmatpush1.bf16.msra.mxu0 %v965
    %994 = vmatprep.subr.bf16.mxu0 0
    %995 = vmatpush1.bf16.msra.mxu0 %v964
    %996 = vmatprep.subr.bf16.mxu0 0
    %997 = vmatpush2.bf16.msra.mxu0 0
    %998 = vmatprep.subr.bf16.mxu0 0
    %999 = vmatpush2.bf16.msra.mxu0 0
    %1000 = vmatprep.subr.bf16.mxu0 0
    %1001 = vmatpush2.bf16.msra.mxu0 0
    %1002 = vmatprep.subr.bf16.mxu0 0
    %1003 = vmatpush2.bf16.msra.mxu0 0
    %1004 = vmatprep.subr.bf16.mxu0 0
    %1005 = vmatpush2.bf16.msra.mxu0 0
    %1006 = vmatprep.subr.bf16.mxu0 0
    %1007 = vmatpush2.bf16.msra.mxu0 0
    %1008 = vmatprep.subr.bf16.mxu0 0
    %1009 = vmatpush2.bf16.msra.mxu0 0
    %1010 = vmatprep.subr.bf16.mxu0 0
    %1011 = vmatpush2.bf16.msra.mxu0 0
    %1012 = vmatprep.mubr.bf16.mxu0 0
    %1013 = vmatmul.mubr.bf16.gmra.mxu0 %v908
    %v1014 = vpop.f32.mrf.mxu0
    %v1015 = vadd.f32 %v930, %v1014
    %v1016 = vpop.f32.mrf.mxu0
    %v1017 = vpop.f32.mrf.mxu0
    %v1018 = vpop.f32.mrf.mxu0
    %1019 = vdwg.mxu0
    %1020 = vmax.xlane.f32.xlu0 %v1015
    %v1021 = vpop.xlane.xlu0 %1020
    %v1022 = vsub.f32 %v1015, %v1021
    %v1023 = vmul.f32 %v1022, 1.442695
    %v1024 = vpow.pop %v1023
    %1025 = vadd.xlane.f32.xlu0 %v1024
    %v1026 = vpop.xlane.xlu0 %1025
    %v1027 = vlog2.pop %v1026
    %v1028 = vmul.f32 %v1027, 0.6931472
    %v1029 = vadd.f32 %v1028, %v1021
    %v1030 = vsub.f32 %v1015, %v1029
    %1031 = vst [vmem:[#allocation13] sm:$0xff] %v1030
    // Predicated region
    $region78: #{_forward_impl.1} parent=1 // pred_check
      _
    $region79: #{_forward_impl.1} parent=1 // pred_check_branch
      %1033 = sbr.rel (0) target = $region81
    $region80: #{_forward_impl.1} parent=1 // pred_region
      %s1035 = ssub.s32 128, 128
      %1036 = vsyncadd [#allocation4], %s1035
      %s1038 = sshll.u32 [#allocation13], 4
      %s1039 = int_to_ptr.vmem [resolvable:$true] %s1038
      %1041 = dma.vmem_to_hbm [thread:$0]  %s1039, 128, %s13, [#allocation4]
    $region81: #{_forward_impl.1} parent=1 // pred_fallthru
      _
    // Predicated region
    $region82: #{_forward_impl.1} parent=1 // pred_check
      _
    $region83: #{_forward_impl.1} parent=1 // pred_check_branch
      %1043 = sbr.rel (0) target = $region85
    $region84: #{_forward_impl.1} parent=1 // pred_region
      %1044 = dma.done [#allocation4], 128
    $region85: #{_forward_impl.1} parent=1 // pred_fallthru
      _
    %1045 = vsyncpa [#allocation3], 1
    %1046 = vsyncpa [#allocation6], 1
    %1047 = vsyncpa [#allocation9], 1
    %1048 = vsyncpa [#allocation12], 1
    %1049 = vsyncpa [#allocation4], 1

</llo_original>
